<compile_context>
chip_gen: v7x
topology: tpu7x:2x2x1
jax: 0.10.0
libtpu: 0.0.40
codegen_flags: <defaults>
</compile_context>

<pallas_src>
import functools

import jax
import jax.numpy as jnp
from jax import lax
from jax.experimental import pallas as pl
from jax.experimental.pallas import tpu as pltpu


# ----------------------- matching glue (plain JAX) ------------------------ #
def point_form(priors):
    return jnp.concatenate([priors[:, :2] - priors[:, 2:] / 2.0,
                            priors[:, :2] + priors[:, 2:] / 2.0], axis=1)


def jaccard(box_a, box_b):
    max_xy = jnp.minimum(box_a[:, None, 2:], box_b[None, :, 2:])
    min_xy = jnp.maximum(box_a[:, None, :2], box_b[None, :, :2])
    inter = jnp.maximum(max_xy - min_xy, 0.0)
    inter = inter[..., 0] * inter[..., 1]
    area_a = ((box_a[:, 2] - box_a[:, 0]) * (box_a[:, 3] - box_a[:, 1]))[:, None]
    area_b = ((box_b[:, 2] - box_b[:, 0]) * (box_b[:, 3] - box_b[:, 1]))[None, :]
    return inter / (area_a + area_b - inter)


def encode(matched, priors, variances):
    g_cxcy = (matched[:, :2] + matched[:, 2:]) / 2.0 - priors[:, :2]
    g_cxcy = g_cxcy / (variances[0] * priors[:, 2:])
    g_wh = (matched[:, 2:] - matched[:, :2]) / priors[:, 2:]
    g_wh = jnp.log(g_wh) / variances[1]
    return jnp.concatenate([g_cxcy, g_wh], axis=1)


def encode_landm(matched, priors, variances):
    p = matched.shape[0]
    m = matched.reshape(p, 5, 2)
    pr_cxcy = jnp.broadcast_to(priors[:, None, 0:2], (p, 5, 2))
    pr_wh = jnp.broadcast_to(priors[:, None, 2:4], (p, 5, 2))
    g = (m - pr_cxcy) / (variances[0] * pr_wh)
    return g.reshape(p, 10)


def match_gender(threshold, truths, priors, variances, labels, landms, genders):
    num_t = truths.shape[0]
    num_p = priors.shape[0]
    overlaps = jaccard(truths, point_form(priors))          # [T, P]
    best_prior_overlap = overlaps.max(axis=1)               # [T]
    best_prior_idx = overlaps.argmax(axis=1)                # [T]
    valid_gt = best_prior_overlap >= 0.2
    any_valid = jnp.any(valid_gt)
    best_truth_overlap = overlaps.max(axis=0)                # [P]
    best_truth_idx = overlaps.argmax(axis=0)                 # [P]
    fill_idx = jnp.where(valid_gt, best_prior_idx, num_p)    # OOB -> dropped
    best_truth_overlap = best_truth_overlap.at[fill_idx].set(2.0, mode="drop")
    best_truth_idx = best_truth_idx.at[best_prior_idx].set(jnp.arange(num_t))
    matches = truths[best_truth_idx]
    conf = labels[best_truth_idx]
    conf = jnp.where(best_truth_overlap < threshold, 0.0, conf)
    conf = jnp.where(any_valid, conf, 0.0)                   # early-return branch
    loc = encode(matches, priors, variances)
    loc = jnp.where(any_valid, loc, 0.0)
    # NOTE: in the no-valid-GT early-return path only loc/conf are zeroed (as
    # in the reference); landm_t / gender_t are left as gathered values but are
    # always masked downstream because conf==0 makes pos1/pos2 empty.
    landm = encode_landm(landms[best_truth_idx], priors, variances)
    gender = genders[best_truth_idx]
    return loc, conf.astype(jnp.int32), landm, gender.astype(jnp.int32)


# ------------------------------ Pallas kernel ------------------------------ #
def _mbox_loss_kernel(loc_p_ref, conf_p_ref, landm_p_ref, gender_p_ref,
                      loc_t_ref, landm_t_ref, conf_t_ref, gender_t_ref,
                      out_ref, *, neg_pos_ratio, num_classes):
    # Lane-dense layout: every block is [1, feat, P]; priors live on lanes.
    conf_t = conf_t_ref[0]            # [1, P] int32 (labels -1/0/1)
    gender_t = gender_t_ref[0]        # [1, P] int32
    loc_p = loc_p_ref[0]              # [4, P]
    loc_t = loc_t_ref[0]              # [4, P]
    landm_p = landm_p_ref[0]          # [10, P]
    landm_t = landm_t_ref[0]          # [10, P]
    conf_p = conf_p_ref[0]            # [C, P]
    gender_p = gender_p_ref[0]        # [2, P]

    num_priors = conf_t.shape[1]

    pos = conf_t != 0                                   # faces (incl. label -1)
    pos1 = conf_t > 0                                   # landmark-valid faces
    pos2 = conf_t.astype(jnp.float32) > 0.9             # gender-valid (== pos1 for int labels)

    def smooth_l1_sum(pred, tgt, mask):
        d = pred - tgt
        ad = jnp.abs(d)
        l = jnp.where(ad < 1.0, 0.5 * d * d, ad - 0.5)
        return jnp.sum(jnp.where(mask, l, 0.0))          # mask [1,P] broadcasts over feat rows

    loss_l = smooth_l1_sum(loc_p, loc_t, pos)
    loss_landm = smooth_l1_sum(landm_p, landm_t, pos1)

    # gender: BCE(softmax(z), one_hot(t)) over 2 classes == -2*clamp(log_sigmoid(z_t - z_o), -100)
    z0 = gender_p[0:1, :]
    z1 = gender_p[1:2, :]
    d_g = jnp.where(gender_t == 1, z1 - z0, z0 - z1)     # z_target - z_other
    log_pt = jnp.minimum(d_g, 0.0) - jnp.log(1.0 + jnp.exp(-jnp.abs(d_g)))
    log_pt = jnp.maximum(log_pt, -100.0)                 # torch BCELoss clamp
    bce = -2.0 * log_pt
    loss_gender = jnp.sum(jnp.where(pos2, bce, 0.0))

    # classification CE: lse(conf) - conf[target]; target = 1 at pos else 0.
    c0 = conf_p[0:1, :]
    c1 = conf_p[1:2, :]
    if num_classes == 2:
        m = jnp.maximum(c0, c1)
        lse = m + jnp.log(jnp.exp(c0 - m) + jnp.exp(c1 - m))
    else:
        cmax = jnp.max(conf_p, axis=0, keepdims=True)
        lse = jnp.log(jnp.sum(jnp.exp(conf_p - cmax), axis=0, keepdims=True)) + cmax
    gathered = jnp.where(pos, c1, c0)                    # [1,P]
    base_ce = lse - gathered                             # [1,P], always >= 0
    pos_ce_sum = jnp.sum(jnp.where(pos, base_ce, 0.0))

    num_pos = jnp.sum(pos.astype(jnp.int32))
    num_neg = jnp.minimum(neg_pos_ratio * num_pos, num_priors - 1)

    # Hard-negative mining without the O(P^2) rank matrix:
    # sum of the `num_neg` largest values of v (positives pinned to 0, matching
    # the reference where their mined loss is zeroed).  Tied values at the
    # selection boundary contribute identically, so the sum equals torch's.
    v = jnp.where(pos, 0.0, base_ce)                     # [1,P], v >= 0
    bits = pltpu.bitcast(v, jnp.int32)                   # order-preserving for v >= 0
    prefix = jnp.int32(0)
    for bit in range(30, -1, -1):                        # 31-step bit-descend k-th largest
        cand = prefix | jnp.int32(1 << bit)
        cnt = jnp.sum((bits >= cand).astype(jnp.int32))
        prefix = jnp.where(cnt >= num_neg, cand, prefix)
    mask_gt = bits > prefix
    count_gt = jnp.sum(mask_gt.astype(jnp.int32))
    sum_gt = jnp.sum(jnp.where(mask_gt, v, 0.0))
    thr = jnp.max(jnp.where(bits == prefix, v, 0.0))     # k-th largest value (>= 0)
    neg_sum = sum_gt + (num_neg - count_gt).astype(jnp.float32) * thr
    neg_sum = jnp.where(num_neg > 0, neg_sum, 0.0)

    loss_c = pos_ce_sum + neg_sum

    n = num_pos.astype(jnp.float32)
    n1 = jnp.sum(pos1.astype(jnp.int32)).astype(jnp.float32)
    n2 = jnp.sum(pos2.astype(jnp.int32)).astype(jnp.float32)

    # Per-batch partial sums into a lane-dense (1,1,128) output block.
    lane = lax.broadcasted_iota(jnp.int32, out_ref.shape, 2)
    vec = (jnp.where(lane == 0, loss_l, 0.0)
           + jnp.where(lane == 1, loss_c, 0.0)
           + jnp.where(lane == 2, loss_landm, 0.0)
           + jnp.where(lane == 3, loss_gender, 0.0)
           + jnp.where(lane == 4, n, 0.0)
           + jnp.where(lane == 5, n1, 0.0)
           + jnp.where(lane == 6, n2, 0.0))
    out_ref[...] = vec


# --------------------------------- wrapper --------------------------------- #
def multibox_loss_with_gender(predictions, priors, targets, *,
                              num_classes=2, overlap_thresh=0.35,
                              neg_pos_ratio=7, variance=(0.1, 0.2)):
    loc_data, conf_data, landm_data, gender_data = predictions
    num, num_priors, _ = loc_data.shape

    # vmapped matching (one fused XLA computation; assumes targets is [B, T, 16]).
    # TODO(synk): variable GT counts per image require padding to a common T.
    def match_one(t):
        return match_gender(overlap_thresh, t[:, :4], priors, variance,
                            t[:, 14], t[:, 4:14], t[:, -1])

    loc_t, conf_t, landm_t, gender_t = jax.vmap(match_one)(targets)

    # Lane-dense layout: [B, P, F] -> [B, F, P]; priors on the 128-wide lane axis.
    def to_fp(x):
        return jnp.swapaxes(x, 1, 2).astype(jnp.float32)

    loc_p = to_fp(loc_data)
    conf_p = to_fp(conf_data)
    landm_p = to_fp(landm_data)
    gender_p = to_fp(gender_data)
    loc_tT = to_fp(loc_t)
    landm_tT = to_fp(landm_t)
    conf_tT = conf_t.astype(jnp.int32)[:, None, :]        # [B, 1, P]
    gender_tT = gender_t.astype(jnp.int32)[:, None, :]    # [B, 1, P]

    kernel = functools.partial(_mbox_loss_kernel,
                               neg_pos_ratio=neg_pos_ratio,
                               num_classes=num_classes)

    def spec(f):
        return pl.BlockSpec((1, f, num_priors), lambda b: (b, 0, 0))

    sums = pl.pallas_call(
        kernel,
        out_shape=jax.ShapeDtypeStruct((num, 1, 128), jnp.float32),
        grid_spec=pltpu.PrefetchScalarGridSpec(
            num_scalar_prefetch=0,
            grid=(num,),
            in_specs=[spec(4), spec(num_classes), spec(10), spec(2),
                      spec(4), spec(10), spec(1), spec(1)],
            out_specs=pl.BlockSpec((1, 1, 128), lambda b: (b, 0, 0)),
        ),
        compiler_params=pltpu.CompilerParams(
            dimension_semantics=("parallel",)),
    )(loc_p, conf_p, landm_p, gender_p, loc_tT, landm_tT, conf_tT, gender_tT)

    tot = jnp.sum(sums[:, 0, :], axis=0)                  # [128] batch-reduced partials
    loss_l_s, loss_c_s, loss_landm_s, loss_gender_s = tot[0], tot[1], tot[2], tot[3]
    n = jnp.maximum(tot[4], 1.0)
    n1 = jnp.maximum(tot[5], 1.0)
    n2 = jnp.maximum(tot[6], 1.0)
    return (loss_l_s / n, loss_c_s / n, loss_landm_s / n1, loss_gender_s / n2)


# ----------------------------------- main ----------------------------------- #
if __name__ == "__main__":
    key = jax.random.PRNGKey(0)
    B, P, C = 2, 128, 2
    k1, k2, k3, k4, k5 = jax.random.split(key, 5)

    loc_data = 0.1 * jax.random.normal(k1, (B, P, 4), jnp.float32)
    conf_data = jax.random.normal(k2, (B, P, C), jnp.float32)
    landm_data = 0.1 * jax.random.normal(k3, (B, P, 10), jnp.float32)
    gender_data = jax.random.normal(k4, (B, P, 2), jnp.float32)

    # priors: 16x8 grid of (cx, cy, w, h) in [0, 1]
    cols = (jnp.arange(16, dtype=jnp.float32) + 0.5) / 16.0
    rows = (jnp.arange(8, dtype=jnp.float32) + 0.5) / 8.0
    cx, cy = jnp.meshgrid(cols, rows)
    priors = jnp.stack([cx.reshape(-1), cy.reshape(-1),
                        jnp.full((P,), 0.15, jnp.float32),
                        jnp.full((P,), 0.20, jnp.float32)], axis=1)

    # targets: [B, T, 16] = box(4) | landmarks(10) | label(1) | gender(1)
    def make_target(boxes, labels, genders, kk):
        t = len(boxes)
        landms = jax.random.uniform(kk, (t, 10), jnp.float32)
        return jnp.concatenate([jnp.array(boxes, jnp.float32),
                                landms,
                                jnp.array(labels, jnp.float32)[:, None],
                                jnp.array(genders, jnp.float32)[:, None]],
                               axis=1)

    t0 = make_target([[0.05, 0.05, 0.25, 0.30],
                      [0.50, 0.40, 0.70, 0.65],
                      [0.70, 0.70, 0.90, 0.95]],
                     [1.0, 1.0, -1.0], [0.0, 1.0, 1.0],
                     jax.random.fold_in(k5, 0))
    t1 = make_target([[0.10, 0.55, 0.30, 0.80],
                      [0.60, 0.10, 0.80, 0.35],
                      [0.30, 0.30, 0.50, 0.55]],
                     [1.0, -1.0, 1.0], [1.0, 0.0, 1.0],
                     jax.random.fold_in(k5, 1))
    targets = jnp.stack([t0, t1])

    losses = multibox_loss_with_gender(
        (loc_data, conf_data, landm_data, gender_data), priors, targets,
        num_classes=C, overlap_thresh=0.35, neg_pos_ratio=7)
    losses = jax.block_until_ready(losses)
    assert all(bool(jnp.isfinite(l)) for l in losses)
    print("KERNEL_OK")
</pallas_src>

<mosaic_0001>
module attributes {stable_mosaic.version = 11 : i64} {
  func.func @_mbox_loss_kernel(%arg0: i32, %arg1: memref<1x4x128xf32, #tpu.memory_space<vmem>>, %arg2: memref<1x2x128xf32, #tpu.memory_space<vmem>>, %arg3: memref<1x10x128xf32, #tpu.memory_space<vmem>>, %arg4: memref<1x2x128xf32, #tpu.memory_space<vmem>>, %arg5: memref<1x4x128xf32, #tpu.memory_space<vmem>>, %arg6: memref<1x10x128xf32, #tpu.memory_space<vmem>>, %arg7: memref<1x1x128xi32, #tpu.memory_space<vmem>>, %arg8: memref<1x1x128xi32, #tpu.memory_space<vmem>>, %arg9: memref<1x1x128xf32, #tpu.memory_space<vmem>>) attributes {dimension_semantics = [#tpu.dimension_semantics<parallel>], iteration_bounds = array<i64: 2>, scalar_prefetch = 0 : i64, scratch_operands = 0 : i64, tpu.core_type = #tpu.core_type<tc>, window_params = [{transform_indices = @transform_0, window_bounds = array<i64: 1, 4, 128>}, {transform_indices = @transform_1, window_bounds = array<i64: 1, 2, 128>}, {transform_indices = @transform_2, window_bounds = array<i64: 1, 10, 128>}, {transform_indices = @transform_3, window_bounds = array<i64: 1, 2, 128>}, {transform_indices = @transform_4, window_bounds = array<i64: 1, 4, 128>}, {transform_indices = @transform_5, window_bounds = array<i64: 1, 10, 128>}, {transform_indices = @transform_6, window_bounds = array<i64: 1, 1, 128>}, {transform_indices = @transform_7, window_bounds = array<i64: 1, 1, 128>}, {transform_indices = @transform_8, window_bounds = array<i64: 1, 1, 128>}]} {
    %c0 = arith.constant 0 : index
    %c0_0 = arith.constant 0 : index
    %c0_1 = arith.constant 0 : index
    %0 = vector.load %arg7[%c0, %c0_0, %c0_1] : memref<1x1x128xi32, #tpu.memory_space<vmem>>, vector<1x1x128xi32>
    %1 = vector.shape_cast %0 : vector<1x1x128xi32> to vector<1x128xi32>
    %c0_2 = arith.constant 0 : index
    %c0_3 = arith.constant 0 : index
    %c0_4 = arith.constant 0 : index
    %2 = vector.load %arg8[%c0_2, %c0_3, %c0_4] : memref<1x1x128xi32, #tpu.memory_space<vmem>>, vector<1x1x128xi32>
    %3 = vector.shape_cast %2 : vector<1x1x128xi32> to vector<1x128xi32>
    %c0_5 = arith.constant 0 : index
    %c0_6 = arith.constant 0 : index
    %c0_7 = arith.constant 0 : index
    %4 = vector.load %arg1[%c0_5, %c0_6, %c0_7] : memref<1x4x128xf32, #tpu.memory_space<vmem>>, vector<1x4x128xf32>
    %5 = vector.shape_cast %4 : vector<1x4x128xf32> to vector<4x128xf32>
    %c0_8 = arith.constant 0 : index
    %c0_9 = arith.constant 0 : index
    %c0_10 = arith.constant 0 : index
    %6 = vector.load %arg5[%c0_8, %c0_9, %c0_10] : memref<1x4x128xf32, #tpu.memory_space<vmem>>, vector<1x4x128xf32>
    %7 = vector.shape_cast %6 : vector<1x4x128xf32> to vector<4x128xf32>
    %c0_11 = arith.constant 0 : index
    %c0_12 = arith.constant 0 : index
    %c0_13 = arith.constant 0 : index
    %8 = vector.load %arg3[%c0_11, %c0_12, %c0_13] : memref<1x10x128xf32, #tpu.memory_space<vmem>>, vector<1x10x128xf32>
    %9 = vector.shape_cast %8 : vector<1x10x128xf32> to vector<10x128xf32>
    %c0_14 = arith.constant 0 : index
    %c0_15 = arith.constant 0 : index
    %c0_16 = arith.constant 0 : index
    %10 = vector.load %arg6[%c0_14, %c0_15, %c0_16] : memref<1x10x128xf32, #tpu.memory_space<vmem>>, vector<1x10x128xf32>
    %11 = vector.shape_cast %10 : vector<1x10x128xf32> to vector<10x128xf32>
    %c0_17 = arith.constant 0 : index
    %c0_18 = arith.constant 0 : index
    %c0_19 = arith.constant 0 : index
    %12 = vector.load %arg2[%c0_17, %c0_18, %c0_19] : memref<1x2x128xf32, #tpu.memory_space<vmem>>, vector<1x2x128xf32>
    %13 = vector.shape_cast %12 : vector<1x2x128xf32> to vector<2x128xf32>
    %c0_20 = arith.constant 0 : index
    %c0_21 = arith.constant 0 : index
    %c0_22 = arith.constant 0 : index
    %14 = vector.load %arg4[%c0_20, %c0_21, %c0_22] : memref<1x2x128xf32, #tpu.memory_space<vmem>>, vector<1x2x128xf32>
    %15 = vector.shape_cast %14 : vector<1x2x128xf32> to vector<2x128xf32>
    %c0_i32 = arith.constant 0 : i32
    %16 = vector.broadcast %c0_i32 : i32 to vector<1x128xi32>
    %17 = arith.cmpi ne, %1, %16 : vector<1x128xi32>
    %c0_i32_23 = arith.constant 0 : i32
    %18 = vector.broadcast %c0_i32_23 : i32 to vector<1x128xi32>
    %19 = arith.cmpi sgt, %1, %18 : vector<1x128xi32>
    %20 = arith.sitofp %1 : vector<1x128xi32> to vector<1x128xf32>
    %cst = arith.constant 0.899999976 : f32
    %21 = vector.broadcast %cst : f32 to vector<1x128xf32>
    %22 = arith.cmpf ogt, %20, %21 : vector<1x128xf32>
    %23 = arith.subf %5, %7 : vector<4x128xf32>
    %24 = math.absf %23 : vector<4x128xf32>
    %cst_24 = arith.constant 1.000000e+00 : f32
    %25 = vector.broadcast %cst_24 : f32 to vector<4x128xf32>
    %26 = arith.cmpf olt, %24, %25 : vector<4x128xf32>
    %cst_25 = arith.constant 5.000000e-01 : f32
    %27 = vector.broadcast %cst_25 : f32 to vector<4x128xf32>
    %28 = arith.mulf %27, %23 : vector<4x128xf32>
    %29 = arith.mulf %28, %23 : vector<4x128xf32>
    %cst_26 = arith.constant 5.000000e-01 : f32
    %30 = vector.broadcast %cst_26 : f32 to vector<4x128xf32>
    %31 = arith.subf %24, %30 : vector<4x128xf32>
    %32 = arith.select %26, %29, %31 : vector<4x128xi1>, vector<4x128xf32>
    %cst_27 = arith.constant 0.000000e+00 : f32
    %33 = vector.shape_cast %17 : vector<1x128xi1> to vector<1x128xi1>
    %34 = vector.broadcast %33 : vector<1x128xi1> to vector<4x128xi1>
    %35 = vector.broadcast %cst_27 : f32 to vector<4x128xf32>
    %36 = arith.select %34, %32, %35 : vector<4x128xi1>, vector<4x128xf32>
    %37 = vector.shape_cast %36 : vector<4x128xf32> to vector<1x4x128xf32>
    %cst_28 = arith.constant dense<0.000000e+00> : vector<1xf32>
    %38 = vector.multi_reduction <add>, %37, %cst_28 [1, 2] : vector<1x4x128xf32> to vector<1xf32>
    %39 = vector.shape_cast %38 : vector<1xf32> to vector<1x1x1xf32>
    %40 = vector.extract %39[0, 0, 0] : f32 from vector<1x1x1xf32>
    %41 = arith.subf %9, %11 : vector<10x128xf32>
    %42 = math.absf %41 : vector<10x128xf32>
    %cst_29 = arith.constant 1.000000e+00 : f32
    %43 = vector.broadcast %cst_29 : f32 to vector<10x128xf32>
    %44 = arith.cmpf olt, %42, %43 : vector<10x128xf32>
    %cst_30 = arith.constant 5.000000e-01 : f32
    %45 = vector.broadcast %cst_30 : f32 to vector<10x128xf32>
    %46 = arith.mulf %45, %41 : vector<10x128xf32>
    %47 = arith.mulf %46, %41 : vector<10x128xf32>
    %cst_31 = arith.constant 5.000000e-01 : f32
    %48 = vector.broadcast %cst_31 : f32 to vector<10x128xf32>
    %49 = arith.subf %42, %48 : vector<10x128xf32>
    %50 = arith.select %44, %47, %49 : vector<10x128xi1>, vector<10x128xf32>
    %cst_32 = arith.constant 0.000000e+00 : f32
    %51 = vector.shape_cast %19 : vector<1x128xi1> to vector<1x128xi1>
    %52 = vector.broadcast %51 : vector<1x128xi1> to vector<10x128xi1>
    %53 = vector.broadcast %cst_32 : f32 to vector<10x128xf32>
    %54 = arith.select %52, %50, %53 : vector<10x128xi1>, vector<10x128xf32>
    %55 = vector.shape_cast %54 : vector<10x128xf32> to vector<1x10x128xf32>
    %cst_33 = arith.constant dense<0.000000e+00> : vector<1xf32>
    %56 = vector.multi_reduction <add>, %55, %cst_33 [1, 2] : vector<1x10x128xf32> to vector<1xf32>
    %57 = vector.shape_cast %56 : vector<1xf32> to vector<1x1x1xf32>
    %58 = vector.extract %57[0, 0, 0] : f32 from vector<1x1x1xf32>
    %59 = vector.extract_strided_slice %15 {offsets = [0, 0], sizes = [1, 128], strides = [1, 1]} : vector<2x128xf32> to vector<1x128xf32>
    %60 = vector.extract_strided_slice %15 {offsets = [1, 0], sizes = [1, 128], strides = [1, 1]} : vector<2x128xf32> to vector<1x128xf32>
    %c1_i32 = arith.constant 1 : i32
    %61 = vector.broadcast %c1_i32 : i32 to vector<1x128xi32>
    %62 = arith.cmpi eq, %3, %61 : vector<1x128xi32>
    %63 = arith.subf %60, %59 : vector<1x128xf32>
    %64 = arith.subf %59, %60 : vector<1x128xf32>
    %65 = arith.select %62, %63, %64 : vector<1x128xi1>, vector<1x128xf32>
    %cst_34 = arith.constant 0.000000e+00 : f32
    %66 = vector.broadcast %cst_34 : f32 to vector<1x128xf32>
    %67 = arith.minimumf %65, %66 : vector<1x128xf32>
    %68 = math.absf %65 : vector<1x128xf32>
    %cst_35 = arith.constant 0.000000e+00 : f32
    %69 = vector.broadcast %cst_35 : f32 to vector<1x128xf32>
    %70 = arith.subf %69, %68 : vector<1x128xf32>
    %71 = math.exp %70 : vector<1x128xf32>
    %cst_36 = arith.constant 1.000000e+00 : f32
    %72 = vector.broadcast %cst_36 : f32 to vector<1x128xf32>
    %73 = arith.addf %72, %71 : vector<1x128xf32>
    %74 = math.log %73 : vector<1x128xf32>
    %75 = arith.subf %67, %74 : vector<1x128xf32>
    %cst_37 = arith.constant -1.000000e+02 : f32
    %76 = vector.broadcast %cst_37 : f32 to vector<1x128xf32>
    %77 = arith.maximumf %75, %76 : vector<1x128xf32>
    %cst_38 = arith.constant -2.000000e+00 : f32
    %78 = vector.broadcast %cst_38 : f32 to vector<1x128xf32>
    %79 = arith.mulf %78, %77 : vector<1x128xf32>
    %cst_39 = arith.constant 0.000000e+00 : f32
    %80 = vector.broadcast %cst_39 : f32 to vector<1x128xf32>
    %81 = arith.select %22, %79, %80 : vector<1x128xi1>, vector<1x128xf32>
    %82 = vector.shape_cast %81 : vector<1x128xf32> to vector<1x1x128xf32>
    %cst_40 = arith.constant dense<0.000000e+00> : vector<1xf32>
    %83 = vector.multi_reduction <add>, %82, %cst_40 [1, 2] : vector<1x1x128xf32> to vector<1xf32>
    %84 = vector.shape_cast %83 : vector<1xf32> to vector<1x1x1xf32>
    %85 = vector.extract %84[0, 0, 0] : f32 from vector<1x1x1xf32>
    %86 = vector.extract_strided_slice %13 {offsets = [0, 0], sizes = [1, 128], strides = [1, 1]} : vector<2x128xf32> to vector<1x128xf32>
    %87 = vector.extract_strided_slice %13 {offsets = [1, 0], sizes = [1, 128], strides = [1, 1]} : vector<2x128xf32> to vector<1x128xf32>
    %88 = arith.maximumf %86, %87 : vector<1x128xf32>
    %89 = arith.subf %86, %88 : vector<1x128xf32>
    %90 = math.exp %89 : vector<1x128xf32>
    %91 = arith.subf %87, %88 : vector<1x128xf32>
    %92 = math.exp %91 : vector<1x128xf32>
    %93 = arith.addf %90, %92 : vector<1x128xf32>
    %94 = math.log %93 : vector<1x128xf32>
    %95 = arith.addf %88, %94 : vector<1x128xf32>
    %96 = arith.select %17, %87, %86 : vector<1x128xi1>, vector<1x128xf32>
    %97 = arith.subf %95, %96 : vector<1x128xf32>
    %cst_41 = arith.constant 0.000000e+00 : f32
    %98 = vector.broadcast %cst_41 : f32 to vector<1x128xf32>
    %99 = arith.select %17, %97, %98 : vector<1x128xi1>, vector<1x128xf32>
    %100 = vector.shape_cast %99 : vector<1x128xf32> to vector<1x1x128xf32>
    %cst_42 = arith.constant dense<0.000000e+00> : vector<1xf32>
    %101 = vector.multi_reduction <add>, %100, %cst_42 [1, 2] : vector<1x1x128xf32> to vector<1xf32>
    %102 = vector.shape_cast %101 : vector<1xf32> to vector<1x1x1xf32>
    %103 = vector.extract %102[0, 0, 0] : f32 from vector<1x1x1xf32>
    %104 = arith.extui %17 : vector<1x128xi1> to vector<1x128xi32>
    %105 = vector.shape_cast %104 : vector<1x128xi32> to vector<1x1x128xi32>
    %cst_43 = arith.constant dense<0> : vector<1xi32>
    %106 = vector.multi_reduction <add>, %105, %cst_43 [1, 2] : vector<1x1x128xi32> to vector<1xi32>
    %107 = vector.shape_cast %106 : vector<1xi32> to vector<1x1x1xi32>
    %108 = vector.extract %107[0, 0, 0] : i32 from vector<1x1x1xi32>
    %c7_i32 = arith.constant 7 : i32
    %109 = arith.muli %c7_i32, %108 : i32
    %c127_i32 = arith.constant 127 : i32
    %110 = arith.minsi %109, %c127_i32 : i32
    %cst_44 = arith.constant 0.000000e+00 : f32
    %111 = vector.broadcast %cst_44 : f32 to vector<1x128xf32>
    %112 = arith.select %17, %111, %97 : vector<1x128xi1>, vector<1x128xf32>
    %113 = tpu.bitcast %112 : vector<1x128xf32> -> vector<1x128xi32>
    %c0_i32_45 = arith.constant 0 : i32
    %c1073741824_i32 = arith.constant 1073741824 : i32
    %114 = arith.ori %c0_i32_45, %c1073741824_i32 : i32
    %115 = vector.broadcast %114 : i32 to vector<1x128xi32>
    %116 = arith.cmpi sge, %113, %115 : vector<1x128xi32>
    %117 = arith.extui %116 : vector<1x128xi1> to vector<1x128xi32>
    %118 = vector.shape_cast %117 : vector<1x128xi32> to vector<1x1x128xi32>
    %cst_46 = arith.constant dense<0> : vector<1xi32>
    %119 = vector.multi_reduction <add>, %118, %cst_46 [1, 2] : vector<1x1x128xi32> to vector<1xi32>
    %120 = vector.shape_cast %119 : vector<1xi32> to vector<1x1x1xi32>
    %121 = vector.extract %120[0, 0, 0] : i32 from vector<1x1x1xi32>
    %122 = arith.cmpi sge, %121, %110 : i32
    %c0_i32_47 = arith.constant 0 : i32
    %123 = arith.select %122, %114, %c0_i32_47 : i32
    %c536870912_i32 = arith.constant 536870912 : i32
    %124 = arith.ori %123, %c536870912_i32 : i32
    %125 = vector.broadcast %124 : i32 to vector<1x128xi32>
    %126 = arith.cmpi sge, %113, %125 : vector<1x128xi32>
    %127 = arith.extui %126 : vector<1x128xi1> to vector<1x128xi32>
    %128 = vector.shape_cast %127 : vector<1x128xi32> to vector<1x1x128xi32>
    %cst_48 = arith.constant dense<0> : vector<1xi32>
    %129 = vector.multi_reduction <add>, %128, %cst_48 [1, 2] : vector<1x1x128xi32> to vector<1xi32>
    %130 = vector.shape_cast %129 : vector<1xi32> to vector<1x1x1xi32>
    %131 = vector.extract %130[0, 0, 0] : i32 from vector<1x1x1xi32>
    %132 = arith.cmpi sge, %131, %110 : i32
    %133 = arith.select %132, %124, %123 : i32
    %c268435456_i32 = arith.constant 268435456 : i32
    %134 = arith.ori %133, %c268435456_i32 : i32
    %135 = vector.broadcast %134 : i32 to vector<1x128xi32>
    %136 = arith.cmpi sge, %113, %135 : vector<1x128xi32>
    %137 = arith.extui %136 : vector<1x128xi1> to vector<1x128xi32>
    %138 = vector.shape_cast %137 : vector<1x128xi32> to vector<1x1x128xi32>
    %cst_49 = arith.constant dense<0> : vector<1xi32>
    %139 = vector.multi_reduction <add>, %138, %cst_49 [1, 2] : vector<1x1x128xi32> to vector<1xi32>
    %140 = vector.shape_cast %139 : vector<1xi32> to vector<1x1x1xi32>
    %141 = vector.extract %140[0, 0, 0] : i32 from vector<1x1x1xi32>
    %142 = arith.cmpi sge, %141, %110 : i32
    %143 = arith.select %142, %134, %133 : i32
    %c134217728_i32 = arith.constant 134217728 : i32
    %144 = arith.ori %143, %c134217728_i32 : i32
    %145 = vector.broadcast %144 : i32 to vector<1x128xi32>
    %146 = arith.cmpi sge, %113, %145 : vector<1x128xi32>
    %147 = arith.extui %146 : vector<1x128xi1> to vector<1x128xi32>
    %148 = vector.shape_cast %147 : vector<1x128xi32> to vector<1x1x128xi32>
    %cst_50 = arith.constant dense<0> : vector<1xi32>
    %149 = vector.multi_reduction <add>, %148, %cst_50 [1, 2] : vector<1x1x128xi32> to vector<1xi32>
    %150 = vector.shape_cast %149 : vector<1xi32> to vector<1x1x1xi32>
    %151 = vector.extract %150[0, 0, 0] : i32 from vector<1x1x1xi32>
    %152 = arith.cmpi sge, %151, %110 : i32
    %153 = arith.select %152, %144, %143 : i32
    %c67108864_i32 = arith.constant 67108864 : i32
    %154 = arith.ori %153, %c67108864_i32 : i32
    %155 = vector.broadcast %154 : i32 to vector<1x128xi32>
    %156 = arith.cmpi sge, %113, %155 : vector<1x128xi32>
    %157 = arith.extui %156 : vector<1x128xi1> to vector<1x128xi32>
    %158 = vector.shape_cast %157 : vector<1x128xi32> to vector<1x1x128xi32>
    %cst_51 = arith.constant dense<0> : vector<1xi32>
    %159 = vector.multi_reduction <add>, %158, %cst_51 [1, 2] : vector<1x1x128xi32> to vector<1xi32>
    %160 = vector.shape_cast %159 : vector<1xi32> to vector<1x1x1xi32>
    %161 = vector.extract %160[0, 0, 0] : i32 from vector<1x1x1xi32>
    %162 = arith.cmpi sge, %161, %110 : i32
    %163 = arith.select %162, %154, %153 : i32
    %c33554432_i32 = arith.constant 33554432 : i32
    %164 = arith.ori %163, %c33554432_i32 : i32
    %165 = vector.broadcast %164 : i32 to vector<1x128xi32>
    %166 = arith.cmpi sge, %113, %165 : vector<1x128xi32>
    %167 = arith.extui %166 : vector<1x128xi1> to vector<1x128xi32>
    %168 = vector.shape_cast %167 : vector<1x128xi32> to vector<1x1x128xi32>
    %cst_52 = arith.constant dense<0> : vector<1xi32>
    %169 = vector.multi_reduction <add>, %168, %cst_52 [1, 2] : vector<1x1x128xi32> to vector<1xi32>
    %170 = vector.shape_cast %169 : vector<1xi32> to vector<1x1x1xi32>
    %171 = vector.extract %170[0, 0, 0] : i32 from vector<1x1x1xi32>
    %172 = arith.cmpi sge, %171, %110 : i32
    %173 = arith.select %172, %164, %163 : i32
    %c16777216_i32 = arith.constant 16777216 : i32
    %174 = arith.ori %173, %c16777216_i32 : i32
    %175 = vector.broadcast %174 : i32 to vector<1x128xi32>
    %176 = arith.cmpi sge, %113, %175 : vector<1x128xi32>
    %177 = arith.extui %176 : vector<1x128xi1> to vector<1x128xi32>
    %178 = vector.shape_cast %177 : vector<1x128xi32> to vector<1x1x128xi32>
    %cst_53 = arith.constant dense<0> : vector<1xi32>
    %179 = vector.multi_reduction <add>, %178, %cst_53 [1, 2] : vector<1x1x128xi32> to vector<1xi32>
    %180 = vector.shape_cast %179 : vector<1xi32> to vector<1x1x1xi32>
    %181 = vector.extract %180[0, 0, 0] : i32 from vector<1x1x1xi32>
    %182 = arith.cmpi sge, %181, %110 : i32
    %183 = arith.select %182, %174, %173 : i32
    %c8388608_i32 = arith.constant 8388608 : i32
    %184 = arith.ori %183, %c8388608_i32 : i32
    %185 = vector.broadcast %184 : i32 to vector<1x128xi32>
    %186 = arith.cmpi sge, %113, %185 : vector<1x128xi32>
    %187 = arith.extui %186 : vector<1x128xi1> to vector<1x128xi32>
    %188 = vector.shape_cast %187 : vector<1x128xi32> to vector<1x1x128xi32>
    %cst_54 = arith.constant dense<0> : vector<1xi32>
    %189 = vector.multi_reduction <add>, %188, %cst_54 [1, 2] : vector<1x1x128xi32> to vector<1xi32>
    %190 = vector.shape_cast %189 : vector<1xi32> to vector<1x1x1xi32>
    %191 = vector.extract %190[0, 0, 0] : i32 from vector<1x1x1xi32>
    %192 = arith.cmpi sge, %191, %110 : i32
    %193 = arith.select %192, %184, %183 : i32
    %c4194304_i32 = arith.constant 4194304 : i32
    %194 = arith.ori %193, %c4194304_i32 : i32
    %195 = vector.broadcast %194 : i32 to vector<1x128xi32>
    %196 = arith.cmpi sge, %113, %195 : vector<1x128xi32>
    %197 = arith.extui %196 : vector<1x128xi1> to vector<1x128xi32>
    %198 = vector.shape_cast %197 : vector<1x128xi32> to vector<1x1x128xi32>
    %cst_55 = arith.constant dense<0> : vector<1xi32>
    %199 = vector.multi_reduction <add>, %198, %cst_55 [1, 2] : vector<1x1x128xi32> to vector<1xi32>
    %200 = vector.shape_cast %199 : vector<1xi32> to vector<1x1x1xi32>
    %201 = vector.extract %200[0, 0, 0] : i32 from vector<1x1x1xi32>
    %202 = arith.cmpi sge, %201, %110 : i32
    %203 = arith.select %202, %194, %193 : i32
    %c2097152_i32 = arith.constant 2097152 : i32
    %204 = arith.ori %203, %c2097152_i32 : i32
    %205 = vector.broadcast %204 : i32 to vector<1x128xi32>
    %206 = arith.cmpi sge, %113, %205 : vector<1x128xi32>
    %207 = arith.extui %206 : vector<1x128xi1> to vector<1x128xi32>
    %208 = vector.shape_cast %207 : vector<1x128xi32> to vector<1x1x128xi32>
    %cst_56 = arith.constant dense<0> : vector<1xi32>
    %209 = vector.multi_reduction <add>, %208, %cst_56 [1, 2] : vector<1x1x128xi32> to vector<1xi32>
    %210 = vector.shape_cast %209 : vector<1xi32> to vector<1x1x1xi32>
    %211 = vector.extract %210[0, 0, 0] : i32 from vector<1x1x1xi32>
    %212 = arith.cmpi sge, %211, %110 : i32
    %213 = arith.select %212, %204, %203 : i32
    %c1048576_i32 = arith.constant 1048576 : i32
    %214 = arith.ori %213, %c1048576_i32 : i32
    %215 = vector.broadcast %214 : i32 to vector<1x128xi32>
    %216 = arith.cmpi sge, %113, %215 : vector<1x128xi32>
    %217 = arith.extui %216 : vector<1x128xi1> to vector<1x128xi32>
    %218 = vector.shape_cast %217 : vector<1x128xi32> to vector<1x1x128xi32>
    %cst_57 = arith.constant dense<0> : vector<1xi32>
    %219 = vector.multi_reduction <add>, %218, %cst_57 [1, 2] : vector<1x1x128xi32> to vector<1xi32>
    %220 = vector.shape_cast %219 : vector<1xi32> to vector<1x1x1xi32>
    %221 = vector.extract %220[0, 0, 0] : i32 from vector<1x1x1xi32>
    %222 = arith.cmpi sge, %221, %110 : i32
    %223 = arith.select %222, %214, %213 : i32
    %c524288_i32 = arith.constant 524288 : i32
    %224 = arith.ori %223, %c524288_i32 : i32
    %225 = vector.broadcast %224 : i32 to vector<1x128xi32>
    %226 = arith.cmpi sge, %113, %225 : vector<1x128xi32>
    %227 = arith.extui %226 : vector<1x128xi1> to vector<1x128xi32>
    %228 = vector.shape_cast %227 : vector<1x128xi32> to vector<1x1x128xi32>
    %cst_58 = arith.constant dense<0> : vector<1xi32>
    %229 = vector.multi_reduction <add>, %228, %cst_58 [1, 2] : vector<1x1x128xi32> to vector<1xi32>
    %230 = vector.shape_cast %229 : vector<1xi32> to vector<1x1x1xi32>
    %231 = vector.extract %230[0, 0, 0] : i32 from vector<1x1x1xi32>
    %232 = arith.cmpi sge, %231, %110 : i32
    %233 = arith.select %232, %224, %223 : i32
    %c262144_i32 = arith.constant 262144 : i32
    %234 = arith.ori %233, %c262144_i32 : i32
    %235 = vector.broadcast %234 : i32 to vector<1x128xi32>
    %236 = arith.cmpi sge, %113, %235 : vector<1x128xi32>
    %237 = arith.extui %236 : vector<1x128xi1> to vector<1x128xi32>
    %238 = vector.shape_cast %237 : vector<1x128xi32> to vector<1x1x128xi32>
    %cst_59 = arith.constant dense<0> : vector<1xi32>
    %239 = vector.multi_reduction <add>, %238, %cst_59 [1, 2] : vector<1x1x128xi32> to vector<1xi32>
    %240 = vector.shape_cast %239 : vector<1xi32> to vector<1x1x1xi32>
    %241 = vector.extract %240[0, 0, 0] : i32 from vector<1x1x1xi32>
    %242 = arith.cmpi sge, %241, %110 : i32
    %243 = arith.select %242, %234, %233 : i32
    %c131072_i32 = arith.constant 131072 : i32
    %244 = arith.ori %243, %c131072_i32 : i32
    %245 = vector.broadcast %244 : i32 to vector<1x128xi32>
    %246 = arith.cmpi sge, %113, %245 : vector<1x128xi32>
    %247 = arith.extui %246 : vector<1x128xi1> to vector<1x128xi32>
    %248 = vector.shape_cast %247 : vector<1x128xi32> to vector<1x1x128xi32>
    %cst_60 = arith.constant dense<0> : vector<1xi32>
    %249 = vector.multi_reduction <add>, %248, %cst_60 [1, 2] : vector<1x1x128xi32> to vector<1xi32>
    %250 = vector.shape_cast %249 : vector<1xi32> to vector<1x1x1xi32>
    %251 = vector.extract %250[0, 0, 0] : i32 from vector<1x1x1xi32>
    %252 = arith.cmpi sge, %251, %110 : i32
    %253 = arith.select %252, %244, %243 : i32
    %c65536_i32 = arith.constant 65536 : i32
    %254 = arith.ori %253, %c65536_i32 : i32
    %255 = vector.broadcast %254 : i32 to vector<1x128xi32>
    %256 = arith.cmpi sge, %113, %255 : vector<1x128xi32>
    %257 = arith.extui %256 : vector<1x128xi1> to vector<1x128xi32>
    %258 = vector.shape_cast %257 : vector<1x128xi32> to vector<1x1x128xi32>
    %cst_61 = arith.constant dense<0> : vector<1xi32>
    %259 = vector.multi_reduction <add>, %258, %cst_61 [1, 2] : vector<1x1x128xi32> to vector<1xi32>
    %260 = vector.shape_cast %259 : vector<1xi32> to vector<1x1x1xi32>
    %261 = vector.extract %260[0, 0, 0] : i32 from vector<1x1x1xi32>
    %262 = arith.cmpi sge, %261, %110 : i32
    %263 = arith.select %262, %254, %253 : i32
    %c32768_i32 = arith.constant 32768 : i32
    %264 = arith.ori %263, %c32768_i32 : i32
    %265 = vector.broadcast %264 : i32 to vector<1x128xi32>
    %266 = arith.cmpi sge, %113, %265 : vector<1x128xi32>
    %267 = arith.extui %266 : vector<1x128xi1> to vector<1x128xi32>
    %268 = vector.shape_cast %267 : vector<1x128xi32> to vector<1x1x128xi32>
    %cst_62 = arith.constant dense<0> : vector<1xi32>
    %269 = vector.multi_reduction <add>, %268, %cst_62 [1, 2] : vector<1x1x128xi32> to vector<1xi32>
    %270 = vector.shape_cast %269 : vector<1xi32> to vector<1x1x1xi32>
    %271 = vector.extract %270[0, 0, 0] : i32 from vector<1x1x1xi32>
    %272 = arith.cmpi sge, %271, %110 : i32
    %273 = arith.select %272, %264, %263 : i32
    %c16384_i32 = arith.constant 16384 : i32
    %274 = arith.ori %273, %c16384_i32 : i32
    %275 = vector.broadcast %274 : i32 to vector<1x128xi32>
    %276 = arith.cmpi sge, %113, %275 : vector<1x128xi32>
    %277 = arith.extui %276 : vector<1x128xi1> to vector<1x128xi32>
    %278 = vector.shape_cast %277 : vector<1x128xi32> to vector<1x1x128xi32>
    %cst_63 = arith.constant dense<0> : vector<1xi32>
    %279 = vector.multi_reduction <add>, %278, %cst_63 [1, 2] : vector<1x1x128xi32> to vector<1xi32>
    %280 = vector.shape_cast %279 : vector<1xi32> to vector<1x1x1xi32>
    %281 = vector.extract %280[0, 0, 0] : i32 from vector<1x1x1xi32>
    %282 = arith.cmpi sge, %281, %110 : i32
    %283 = arith.select %282, %274, %273 : i32
    %c8192_i32 = arith.constant 8192 : i32
    %284 = arith.ori %283, %c8192_i32 : i32
    %285 = vector.broadcast %284 : i32 to vector<1x128xi32>
    %286 = arith.cmpi sge, %113, %285 : vector<1x128xi32>
    %287 = arith.extui %286 : vector<1x128xi1> to vector<1x128xi32>
    %288 = vector.shape_cast %287 : vector<1x128xi32> to vector<1x1x128xi32>
    %cst_64 = arith.constant dense<0> : vector<1xi32>
    %289 = vector.multi_reduction <add>, %288, %cst_64 [1, 2] : vector<1x1x128xi32> to vector<1xi32>
    %290 = vector.shape_cast %289 : vector<1xi32> to vector<1x1x1xi32>
    %291 = vector.extract %290[0, 0, 0] : i32 from vector<1x1x1xi32>
    %292 = arith.cmpi sge, %291, %110 : i32
    %293 = arith.select %292, %284, %283 : i32
    %c4096_i32 = arith.constant 4096 : i32
    %294 = arith.ori %293, %c4096_i32 : i32
    %295 = vector.broadcast %294 : i32 to vector<1x128xi32>
    %296 = arith.cmpi sge, %113, %295 : vector<1x128xi32>
    %297 = arith.extui %296 : vector<1x128xi1> to vector<1x128xi32>
    %298 = vector.shape_cast %297 : vector<1x128xi32> to vector<1x1x128xi32>
    %cst_65 = arith.constant dense<0> : vector<1xi32>
    %299 = vector.multi_reduction <add>, %298, %cst_65 [1, 2] : vector<1x1x128xi32> to vector<1xi32>
    %300 = vector.shape_cast %299 : vector<1xi32> to vector<1x1x1xi32>
    %301 = vector.extract %300[0, 0, 0] : i32 from vector<1x1x1xi32>
    %302 = arith.cmpi sge, %301, %110 : i32
    %303 = arith.select %302, %294, %293 : i32
    %c2048_i32 = arith.constant 2048 : i32
    %304 = arith.ori %303, %c2048_i32 : i32
    %305 = vector.broadcast %304 : i32 to vector<1x128xi32>
    %306 = arith.cmpi sge, %113, %305 : vector<1x128xi32>
    %307 = arith.extui %306 : vector<1x128xi1> to vector<1x128xi32>
    %308 = vector.shape_cast %307 : vector<1x128xi32> to vector<1x1x128xi32>
    %cst_66 = arith.constant dense<0> : vector<1xi32>
    %309 = vector.multi_reduction <add>, %308, %cst_66 [1, 2] : vector<1x1x128xi32> to vector<1xi32>
    %310 = vector.shape_cast %309 : vector<1xi32> to vector<1x1x1xi32>
    %311 = vector.extract %310[0, 0, 0] : i32 from vector<1x1x1xi32>
    %312 = arith.cmpi sge, %311, %110 : i32
    %313 = arith.select %312, %304, %303 : i32
    %c1024_i32 = arith.constant 1024 : i32
    %314 = arith.ori %313, %c1024_i32 : i32
    %315 = vector.broadcast %314 : i32 to vector<1x128xi32>
    %316 = arith.cmpi sge, %113, %315 : vector<1x128xi32>
    %317 = arith.extui %316 : vector<1x128xi1> to vector<1x128xi32>
    %318 = vector.shape_cast %317 : vector<1x128xi32> to vector<1x1x128xi32>
    %cst_67 = arith.constant dense<0> : vector<1xi32>
    %319 = vector.multi_reduction <add>, %318, %cst_67 [1, 2] : vector<1x1x128xi32> to vector<1xi32>
    %320 = vector.shape_cast %319 : vector<1xi32> to vector<1x1x1xi32>
    %321 = vector.extract %320[0, 0, 0] : i32 from vector<1x1x1xi32>
    %322 = arith.cmpi sge, %321, %110 : i32
    %323 = arith.select %322, %314, %313 : i32
    %c512_i32 = arith.constant 512 : i32
    %324 = arith.ori %323, %c512_i32 : i32
    %325 = vector.broadcast %324 : i32 to vector<1x128xi32>
    %326 = arith.cmpi sge, %113, %325 : vector<1x128xi32>
    %327 = arith.extui %326 : vector<1x128xi1> to vector<1x128xi32>
    %328 = vector.shape_cast %327 : vector<1x128xi32> to vector<1x1x128xi32>
    %cst_68 = arith.constant dense<0> : vector<1xi32>
    %329 = vector.multi_reduction <add>, %328, %cst_68 [1, 2] : vector<1x1x128xi32> to vector<1xi32>
    %330 = vector.shape_cast %329 : vector<1xi32> to vector<1x1x1xi32>
    %331 = vector.extract %330[0, 0, 0] : i32 from vector<1x1x1xi32>
    %332 = arith.cmpi sge, %331, %110 : i32
    %333 = arith.select %332, %324, %323 : i32
    %c256_i32 = arith.constant 256 : i32
    %334 = arith.ori %333, %c256_i32 : i32
    %335 = vector.broadcast %334 : i32 to vector<1x128xi32>
    %336 = arith.cmpi sge, %113, %335 : vector<1x128xi32>
    %337 = arith.extui %336 : vector<1x128xi1> to vector<1x128xi32>
    %338 = vector.shape_cast %337 : vector<1x128xi32> to vector<1x1x128xi32>
    %cst_69 = arith.constant dense<0> : vector<1xi32>
    %339 = vector.multi_reduction <add>, %338, %cst_69 [1, 2] : vector<1x1x128xi32> to vector<1xi32>
    %340 = vector.shape_cast %339 : vector<1xi32> to vector<1x1x1xi32>
    %341 = vector.extract %340[0, 0, 0] : i32 from vector<1x1x1xi32>
    %342 = arith.cmpi sge, %341, %110 : i32
    %343 = arith.select %342, %334, %333 : i32
    %c128_i32 = arith.constant 128 : i32
    %344 = arith.ori %343, %c128_i32 : i32
    %345 = vector.broadcast %344 : i32 to vector<1x128xi32>
    %346 = arith.cmpi sge, %113, %345 : vector<1x128xi32>
    %347 = arith.extui %346 : vector<1x128xi1> to vector<1x128xi32>
    %348 = vector.shape_cast %347 : vector<1x128xi32> to vector<1x1x128xi32>
    %cst_70 = arith.constant dense<0> : vector<1xi32>
    %349 = vector.multi_reduction <add>, %348, %cst_70 [1, 2] : vector<1x1x128xi32> to vector<1xi32>
    %350 = vector.shape_cast %349 : vector<1xi32> to vector<1x1x1xi32>
    %351 = vector.extract %350[0, 0, 0] : i32 from vector<1x1x1xi32>
    %352 = arith.cmpi sge, %351, %110 : i32
    %353 = arith.select %352, %344, %343 : i32
    %c64_i32 = arith.constant 64 : i32
    %354 = arith.ori %353, %c64_i32 : i32
    %355 = vector.broadcast %354 : i32 to vector<1x128xi32>
    %356 = arith.cmpi sge, %113, %355 : vector<1x128xi32>
    %357 = arith.extui %356 : vector<1x128xi1> to vector<1x128xi32>
    %358 = vector.shape_cast %357 : vector<1x128xi32> to vector<1x1x128xi32>
    %cst_71 = arith.constant dense<0> : vector<1xi32>
    %359 = vector.multi_reduction <add>, %358, %cst_71 [1, 2] : vector<1x1x128xi32> to vector<1xi32>
    %360 = vector.shape_cast %359 : vector<1xi32> to vector<1x1x1xi32>
    %361 = vector.extract %360[0, 0, 0] : i32 from vector<1x1x1xi32>
    %362 = arith.cmpi sge, %361, %110 : i32
    %363 = arith.select %362, %354, %353 : i32
    %c32_i32 = arith.constant 32 : i32
    %364 = arith.ori %363, %c32_i32 : i32
    %365 = vector.broadcast %364 : i32 to vector<1x128xi32>
    %366 = arith.cmpi sge, %113, %365 : vector<1x128xi32>
    %367 = arith.extui %366 : vector<1x128xi1> to vector<1x128xi32>
    %368 = vector.shape_cast %367 : vector<1x128xi32> to vector<1x1x128xi32>
    %cst_72 = arith.constant dense<0> : vector<1xi32>
    %369 = vector.multi_reduction <add>, %368, %cst_72 [1, 2] : vector<1x1x128xi32> to vector<1xi32>
    %370 = vector.shape_cast %369 : vector<1xi32> to vector<1x1x1xi32>
    %371 = vector.extract %370[0, 0, 0] : i32 from vector<1x1x1xi32>
    %372 = arith.cmpi sge, %371, %110 : i32
    %373 = arith.select %372, %364, %363 : i32
    %c16_i32 = arith.constant 16 : i32
    %374 = arith.ori %373, %c16_i32 : i32
    %375 = vector.broadcast %374 : i32 to vector<1x128xi32>
    %376 = arith.cmpi sge, %113, %375 : vector<1x128xi32>
    %377 = arith.extui %376 : vector<1x128xi1> to vector<1x128xi32>
    %378 = vector.shape_cast %377 : vector<1x128xi32> to vector<1x1x128xi32>
    %cst_73 = arith.constant dense<0> : vector<1xi32>
    %379 = vector.multi_reduction <add>, %378, %cst_73 [1, 2] : vector<1x1x128xi32> to vector<1xi32>
    %380 = vector.shape_cast %379 : vector<1xi32> to vector<1x1x1xi32>
    %381 = vector.extract %380[0, 0, 0] : i32 from vector<1x1x1xi32>
    %382 = arith.cmpi sge, %381, %110 : i32
    %383 = arith.select %382, %374, %373 : i32
    %c8_i32 = arith.constant 8 : i32
    %384 = arith.ori %383, %c8_i32 : i32
    %385 = vector.broadcast %384 : i32 to vector<1x128xi32>
    %386 = arith.cmpi sge, %113, %385 : vector<1x128xi32>
    %387 = arith.extui %386 : vector<1x128xi1> to vector<1x128xi32>
    %388 = vector.shape_cast %387 : vector<1x128xi32> to vector<1x1x128xi32>
    %cst_74 = arith.constant dense<0> : vector<1xi32>
    %389 = vector.multi_reduction <add>, %388, %cst_74 [1, 2] : vector<1x1x128xi32> to vector<1xi32>
    %390 = vector.shape_cast %389 : vector<1xi32> to vector<1x1x1xi32>
    %391 = vector.extract %390[0, 0, 0] : i32 from vector<1x1x1xi32>
    %392 = arith.cmpi sge, %391, %110 : i32
    %393 = arith.select %392, %384, %383 : i32
    %c4_i32 = arith.constant 4 : i32
    %394 = arith.ori %393, %c4_i32 : i32
    %395 = vector.broadcast %394 : i32 to vector<1x128xi32>
    %396 = arith.cmpi sge, %113, %395 : vector<1x128xi32>
    %397 = arith.extui %396 : vector<1x128xi1> to vector<1x128xi32>
    %398 = vector.shape_cast %397 : vector<1x128xi32> to vector<1x1x128xi32>
    %cst_75 = arith.constant dense<0> : vector<1xi32>
    %399 = vector.multi_reduction <add>, %398, %cst_75 [1, 2] : vector<1x1x128xi32> to vector<1xi32>
    %400 = vector.shape_cast %399 : vector<1xi32> to vector<1x1x1xi32>
    %401 = vector.extract %400[0, 0, 0] : i32 from vector<1x1x1xi32>
    %402 = arith.cmpi sge, %401, %110 : i32
    %403 = arith.select %402, %394, %393 : i32
    %c2_i32 = arith.constant 2 : i32
    %404 = arith.ori %403, %c2_i32 : i32
    %405 = vector.broadcast %404 : i32 to vector<1x128xi32>
    %406 = arith.cmpi sge, %113, %405 : vector<1x128xi32>
    %407 = arith.extui %406 : vector<1x128xi1> to vector<1x128xi32>
    %408 = vector.shape_cast %407 : vector<1x128xi32> to vector<1x1x128xi32>
    %cst_76 = arith.constant dense<0> : vector<1xi32>
    %409 = vector.multi_reduction <add>, %408, %cst_76 [1, 2] : vector<1x1x128xi32> to vector<1xi32>
    %410 = vector.shape_cast %409 : vector<1xi32> to vector<1x1x1xi32>
    %411 = vector.extract %410[0, 0, 0] : i32 from vector<1x1x1xi32>
    %412 = arith.cmpi sge, %411, %110 : i32
    %413 = arith.select %412, %404, %403 : i32
    %c1_i32_77 = arith.constant 1 : i32
    %414 = arith.ori %413, %c1_i32_77 : i32
    %415 = vector.broadcast %414 : i32 to vector<1x128xi32>
    %416 = arith.cmpi sge, %113, %415 : vector<1x128xi32>
    %417 = arith.extui %416 : vector<1x128xi1> to vector<1x128xi32>
    %418 = vector.shape_cast %417 : vector<1x128xi32> to vector<1x1x128xi32>
    %cst_78 = arith.constant dense<0> : vector<1xi32>
    %419 = vector.multi_reduction <add>, %418, %cst_78 [1, 2] : vector<1x1x128xi32> to vector<1xi32>
    %420 = vector.shape_cast %419 : vector<1xi32> to vector<1x1x1xi32>
    %421 = vector.extract %420[0, 0, 0] : i32 from vector<1x1x1xi32>
    %422 = arith.cmpi sge, %421, %110 : i32
    %423 = arith.select %422, %414, %413 : i32
    %424 = vector.broadcast %423 : i32 to vector<1x128xi32>
    %425 = arith.cmpi sgt, %113, %424 : vector<1x128xi32>
    %426 = arith.extui %425 : vector<1x128xi1> to vector<1x128xi32>
    %427 = vector.shape_cast %426 : vector<1x128xi32> to vector<1x1x128xi32>
    %cst_79 = arith.constant dense<0> : vector<1xi32>
    %428 = vector.multi_reduction <add>, %427, %cst_79 [1, 2] : vector<1x1x128xi32> to vector<1xi32>
    %429 = vector.shape_cast %428 : vector<1xi32> to vector<1x1x1xi32>
    %430 = vector.extract %429[0, 0, 0] : i32 from vector<1x1x1xi32>
    %cst_80 = arith.constant 0.000000e+00 : f32
    %431 = vector.broadcast %cst_80 : f32 to vector<1x128xf32>
    %432 = arith.select %425, %112, %431 : vector<1x128xi1>, vector<1x128xf32>
    %433 = vector.shape_cast %432 : vector<1x128xf32> to vector<1x1x128xf32>
    %cst_81 = arith.constant dense<0.000000e+00> : vector<1xf32>
    %434 = vector.multi_reduction <add>, %433, %cst_81 [1, 2] : vector<1x1x128xf32> to vector<1xf32>
    %435 = vector.shape_cast %434 : vector<1xf32> to vector<1x1x1xf32>
    %436 = vector.extract %435[0, 0, 0] : f32 from vector<1x1x1xf32>
    %437 = vector.broadcast %423 : i32 to vector<1x128xi32>
    %438 = arith.cmpi eq, %113, %437 : vector<1x128xi32>
    %cst_82 = arith.constant 0.000000e+00 : f32
    %439 = vector.broadcast %cst_82 : f32 to vector<1x128xf32>
    %440 = arith.select %438, %112, %439 : vector<1x128xi1>, vector<1x128xf32>
    %441 = vector.shape_cast %440 : vector<1x128xf32> to vector<1x1x128xf32>
    %cst_83 = arith.constant dense<0xFF800000> : vector<1xf32>
    %442 = vector.multi_reduction <maximumf>, %441, %cst_83 [1, 2] : vector<1x1x128xf32> to vector<1xf32>
    %443 = vector.shape_cast %442 : vector<1xf32> to vector<1x1x1xf32>
    %444 = vector.extract %443[0, 0, 0] : f32 from vector<1x1x1xf32>
    %445 = arith.subi %110, %430 : i32
    %446 = arith.sitofp %445 : i32 to f32
    %447 = arith.mulf %446, %444 : f32
    %448 = arith.addf %436, %447 : f32
    %c0_i32_84 = arith.constant 0 : i32
    %449 = arith.cmpi sgt, %110, %c0_i32_84 : i32
    %cst_85 = arith.constant 0.000000e+00 : f32
    %450 = arith.select %449, %448, %cst_85 : f32
    %451 = arith.addf %103, %450 : f32
    %452 = arith.sitofp %108 : i32 to f32
    %453 = arith.extui %19 : vector<1x128xi1> to vector<1x128xi32>
    %454 = vector.shape_cast %453 : vector<1x128xi32> to vector<1x1x128xi32>
    %cst_86 = arith.constant dense<0> : vector<1xi32>
    %455 = vector.multi_reduction <add>, %454, %cst_86 [1, 2] : vector<1x1x128xi32> to vector<1xi32>
    %456 = vector.shape_cast %455 : vector<1xi32> to vector<1x1x1xi32>
    %457 = vector.extract %456[0, 0, 0] : i32 from vector<1x1x1xi32>
    %458 = arith.sitofp %457 : i32 to f32
    %459 = arith.extui %22 : vector<1x128xi1> to vector<1x128xi32>
    %460 = vector.shape_cast %459 : vector<1x128xi32> to vector<1x1x128xi32>
    %cst_87 = arith.constant dense<0> : vector<1xi32>
    %461 = vector.multi_reduction <add>, %460, %cst_87 [1, 2] : vector<1x1x128xi32> to vector<1xi32>
    %462 = vector.shape_cast %461 : vector<1xi32> to vector<1x1x1xi32>
    %463 = vector.extract %462[0, 0, 0] : i32 from vector<1x1x1xi32>
    %464 = arith.sitofp %463 : i32 to f32
    %465 = tpu.iota {dimensions = array<i32: 2>} : vector<1x1x128xi32>
    %c0_i32_88 = arith.constant 0 : i32
    %466 = vector.broadcast %c0_i32_88 : i32 to vector<1x1x128xi32>
    %467 = arith.cmpi eq, %465, %466 : vector<1x1x128xi32>
    %cst_89 = arith.constant 0.000000e+00 : f32
    %468 = vector.broadcast %40 : f32 to vector<1x1x128xf32>
    %469 = vector.broadcast %cst_89 : f32 to vector<1x1x128xf32>
    %470 = arith.select %467, %468, %469 : vector<1x1x128xi1>, vector<1x1x128xf32>
    %c1_i32_90 = arith.constant 1 : i32
    %471 = vector.broadcast %c1_i32_90 : i32 to vector<1x1x128xi32>
    %472 = arith.cmpi eq, %465, %471 : vector<1x1x128xi32>
    %cst_91 = arith.constant 0.000000e+00 : f32
    %473 = vector.broadcast %451 : f32 to vector<1x1x128xf32>
    %474 = vector.broadcast %cst_91 : f32 to vector<1x1x128xf32>
    %475 = arith.select %472, %473, %474 : vector<1x1x128xi1>, vector<1x1x128xf32>
    %476 = arith.addf %470, %475 : vector<1x1x128xf32>
    %c2_i32_92 = arith.constant 2 : i32
    %477 = vector.broadcast %c2_i32_92 : i32 to vector<1x1x128xi32>
    %478 = arith.cmpi eq, %465, %477 : vector<1x1x128xi32>
    %cst_93 = arith.constant 0.000000e+00 : f32
    %479 = vector.broadcast %58 : f32 to vector<1x1x128xf32>
    %480 = vector.broadcast %cst_93 : f32 to vector<1x1x128xf32>
    %481 = arith.select %478, %479, %480 : vector<1x1x128xi1>, vector<1x1x128xf32>
    %482 = arith.addf %476, %481 : vector<1x1x128xf32>
    %c3_i32 = arith.constant 3 : i32
    %483 = vector.broadcast %c3_i32 : i32 to vector<1x1x128xi32>
    %484 = arith.cmpi eq, %465, %483 : vector<1x1x128xi32>
    %cst_94 = arith.constant 0.000000e+00 : f32
    %485 = vector.broadcast %85 : f32 to vector<1x1x128xf32>
    %486 = vector.broadcast %cst_94 : f32 to vector<1x1x128xf32>
    %487 = arith.select %484, %485, %486 : vector<1x1x128xi1>, vector<1x1x128xf32>
    %488 = arith.addf %482, %487 : vector<1x1x128xf32>
    %c4_i32_95 = arith.constant 4 : i32
    %489 = vector.broadcast %c4_i32_95 : i32 to vector<1x1x128xi32>
    %490 = arith.cmpi eq, %465, %489 : vector<1x1x128xi32>
    %cst_96 = arith.constant 0.000000e+00 : f32
    %491 = vector.broadcast %452 : f32 to vector<1x1x128xf32>
    %492 = vector.broadcast %cst_96 : f32 to vector<1x1x128xf32>
    %493 = arith.select %490, %491, %492 : vector<1x1x128xi1>, vector<1x1x128xf32>
    %494 = arith.addf %488, %493 : vector<1x1x128xf32>
    %c5_i32 = arith.constant 5 : i32
    %495 = vector.broadcast %c5_i32 : i32 to vector<1x1x128xi32>
    %496 = arith.cmpi eq, %465, %495 : vector<1x1x128xi32>
    %cst_97 = arith.constant 0.000000e+00 : f32
    %497 = vector.broadcast %458 : f32 to vector<1x1x128xf32>
    %498 = vector.broadcast %cst_97 : f32 to vector<1x1x128xf32>
    %499 = arith.select %496, %497, %498 : vector<1x1x128xi1>, vector<1x1x128xf32>
    %500 = arith.addf %494, %499 : vector<1x1x128xf32>
    %c6_i32 = arith.constant 6 : i32
    %501 = vector.broadcast %c6_i32 : i32 to vector<1x1x128xi32>
    %502 = arith.cmpi eq, %465, %501 : vector<1x1x128xi32>
    %cst_98 = arith.constant 0.000000e+00 : f32
    %503 = vector.broadcast %464 : f32 to vector<1x1x128xf32>
    %504 = vector.broadcast %cst_98 : f32 to vector<1x1x128xf32>
    %505 = arith.select %502, %503, %504 : vector<1x1x128xi1>, vector<1x1x128xf32>
    %506 = arith.addf %500, %505 : vector<1x1x128xf32>
    %c0_99 = arith.constant 0 : index
    %c0_100 = arith.constant 0 : index
    %c0_101 = arith.constant 0 : index
    %507 = vector.load %arg9[%c0_99, %c0_100, %c0_101] : memref<1x1x128xf32, #tpu.memory_space<vmem>>, vector<1x1x128xf32>
    tpu.vector_store %arg9[%c0_99, %c0_100, %c0_101], %506 {strides = array<i32>} : memref<1x1x128xf32, #tpu.memory_space<vmem>>, vector<1x1x128xf32>,
    return
  }
  func.func @transform_0(%arg0: i32) -> (i32, i32, i32) {
    %c0_i32 = arith.constant 0 : i32
    %c0_i32_0 = arith.constant 0 : i32
    %c0_i32_1 = arith.constant 0 : i32
    return %arg0, %c0_i32, %c0_i32_0 : i32, i32, i32
  }
  func.func @transform_1(%arg0: i32) -> (i32, i32, i32) {
    %c0_i32 = arith.constant 0 : i32
    %c0_i32_0 = arith.constant 0 : i32
    %c0_i32_1 = arith.constant 0 : i32
    return %arg0, %c0_i32, %c0_i32_0 : i32, i32, i32
  }
  func.func @transform_2(%arg0: i32) -> (i32, i32, i32) {
    %c0_i32 = arith.constant 0 : i32
    %c0_i32_0 = arith.constant 0 : i32
    %c0_i32_1 = arith.constant 0 : i32
    return %arg0, %c0_i32, %c0_i32_0 : i32, i32, i32
  }
  func.func @transform_3(%arg0: i32) -> (i32, i32, i32) {
    %c0_i32 = arith.constant 0 : i32
    %c0_i32_0 = arith.constant 0 : i32
    %c0_i32_1 = arith.constant 0 : i32
    return %arg0, %c0_i32, %c0_i32_0 : i32, i32, i32
  }
  func.func @transform_4(%arg0: i32) -> (i32, i32, i32) {
    %c0_i32 = arith.constant 0 : i32
    %c0_i32_0 = arith.constant 0 : i32
    %c0_i32_1 = arith.constant 0 : i32
    return %arg0, %c0_i32, %c0_i32_0 : i32, i32, i32
  }
  func.func @transform_5(%arg0: i32) -> (i32, i32, i32) {
    %c0_i32 = arith.constant 0 : i32
    %c0_i32_0 = arith.constant 0 : i32
    %c0_i32_1 = arith.constant 0 : i32
    return %arg0, %c0_i32, %c0_i32_0 : i32, i32, i32
  }
  func.func @transform_6(%arg0: i32) -> (i32, i32, i32) {
    %c0_i32 = arith.constant 0 : i32
    %c0_i32_0 = arith.constant 0 : i32
    %c0_i32_1 = arith.constant 0 : i32
    return %arg0, %c0_i32, %c0_i32_0 : i32, i32, i32
  }
  func.func @transform_7(%arg0: i32) -> (i32, i32, i32) {
    %c0_i32 = arith.constant 0 : i32
    %c0_i32_0 = arith.constant 0 : i32
    %c0_i32_1 = arith.constant 0 : i32
    return %arg0, %c0_i32, %c0_i32_0 : i32, i32, i32
  }
  func.func @transform_8(%arg0: i32) -> (i32, i32, i32) {
    %c0_i32 = arith.constant 0 : i32
    %c0_i32_0 = arith.constant 0 : i32
    %c0_i32_1 = arith.constant 0 : i32
    return %arg0, %c0_i32, %c0_i32_0 : i32, i32, i32
  }
}

</mosaic_0001>

<llo_original>
// kernel: tpu_custom_call.1
$region0: #{tpu_custom_call.1}
  #allocation0 [shape = 'u32[]', space=smem, size = 0x4, offset = 0x4, fixed_abs, tag = 'smem constant byte address 0x4 - core index']
  #allocation1 [shape = 'u32[144,128]{1,0:T(1,128)}', space=vmem, size = 0x12000, scoped, tag = 'internal scratch']
  %s0 = inlined_call_operand.vmem [shape: f32[2,4,128], index: 0, kind: input, shape index: {}]
  %s1 = inlined_call_operand.vmem [shape: f32[2,2,128], index: 1, kind: input, shape index: {}]
  %s2 = inlined_call_operand.vmem [shape: f32[2,10,128], index: 2, kind: input, shape index: {}]
  %s3 = inlined_call_operand.vmem [shape: f32[2,2,128], index: 3, kind: input, shape index: {}]
  %s4 = inlined_call_operand.vmem [shape: f32[2,4,128], index: 4, kind: input, shape index: {}]
  %s5 = inlined_call_operand.vmem [shape: f32[2,10,128], index: 5, kind: input, shape index: {}]
  %s6 = inlined_call_operand.vmem [shape: s32[2,1,128], index: 6, kind: input, shape index: {}]
  %s7 = inlined_call_operand.vmem [shape: s32[2,1,128], index: 7, kind: input, shape index: {}]
  %s8 = inlined_call_operand.hbm [shape: f32[2,1,128], index: 8, kind: output, shape index: {}]
  %s9 = sld [smem:[#allocation0]]
  $region65: #{tpu_custom_call.1} parent=0
    _
  %s11 = ssub.s32 1, %s9
  %s12 = scalar_select 0, %s11, %s9
  $region1: #{tpu_custom_call.1} parent=0
    #allocation2 [shape = 'u8[1024]{0}', space=vmem, size = 0x400, scoped, tag = 'output window, operand 0']
    #allocation3 [shape = 's32[2]{0}', space=sflag, size = 0x8, scoped, tag = 'scoped memory for tpu_custom_call.1']
    %13 = vsyncpa [#allocation3], 0
    %s14 = scalar_lea.sflag [#allocation3], 1
    %15 = vsyncpa %s14, 0
    loop: start=0, step=1, limit=4
    $region2: #{tpu_custom_call.1} parent=1 // loop_pre_header
      _
    $region3: #{tpu_custom_call.1} parent=1 // loop_header
      %s17 = sphi 0, %s21
      %p18 = scmp.ge.s32.totalorder %s17, 4
      %s27 = sphi 0, %s29
      %s30 = sphi 0, %s27
      %s31 = sphi 0, %s30
      %s47 = sphi 0, %s31
      %s53 = sphi 0, %s55
      %s56 = sphi 0, %s53
      %s57 = sphi 0, %s56
      %s73 = sphi 0, %s57
      %s79 = sphi 0, %s81
      %s82 = sphi 0, %s79
      %s83 = sphi 0, %s82
      %s99 = sphi 0, %s83
      %s105 = sphi 0, %s107
      %s108 = sphi 0, %s105
      %s109 = sphi 0, %s108
      %s125 = sphi 0, %s109
      %s131 = sphi 0, %s133
      %s134 = sphi 0, %s131
      %s135 = sphi 0, %s134
      %s151 = sphi 0, %s135
      %s157 = sphi 0, %s159
      %s160 = sphi 0, %s157
      %s161 = sphi 0, %s160
      %s177 = sphi 0, %s161
      %s183 = sphi 0, %s185
      %s186 = sphi 0, %s183
      %s187 = sphi 0, %s186
      %s203 = sphi 0, %s187
      %s209 = sphi 0, %s211
      %s212 = sphi 0, %s209
      %s213 = sphi 0, %s212
      %s229 = sphi 0, %s213
      %s235 = sphi 0, %s237
      %s238 = sphi 0, %s235
      %s239 = sphi 0, %s238
      %s255 = sphi 0, %s239
    $region4: #{tpu_custom_call.1} parent=1 // loop_header_branch
      %20 = sbr.rel (%p18) target = $region8
    $region5: #{tpu_custom_call.1} parent=1 // loop_body
      %s22 = ssub.s32 %s17, 1
      %s23 = ssub.s32 %s17, 2
      %s24 = sadd.s32 %s17, 1
      %s25 = ssub.s32 %s17, %s24
      %p26 = scmp.eq.s32.totalorder %s25, 0
      %s28 = sadd.s32 %s27, 1
      %s29 = scalar_select %p26, %s27, %s28
      %p32 = pneg %p26
      %p33 = scmp.eq.s32.totalorder %s17, 1
      %p34 = por %p32, %p33
      %p35 = scmp.ne.s32.totalorder %s27, %s30
      %p36 = scmp.eq.s32.totalorder %s17, 0
      %p37 = por %p35, %p36
      %p38 = scmp.ne.s32.totalorder %s27, %s30
      %p39 = scmp.eq.s32.totalorder %s22, 1
      %p40 = por %p38, %p39
      %p41 = scmp.ne.s32.totalorder %s30, %s31
      %p42 = scmp.eq.s32.totalorder %s22, 0
      %p43 = por %p41, %p42
      %p44 = scmp.ne.s32.totalorder %s30, %s31
      %p45 = scmp.eq.s32.totalorder %s23, 1
      %p46 = por %p44, %p45
      %p48 = scmp.ne.s32.totalorder %s31, %s47
      %p49 = scmp.eq.s32.totalorder %s23, 0
      %p50 = por %p48, %p49
      %s51 = ssub.s32 %s17, %s24
      %p52 = scmp.eq.s32.totalorder %s51, 0
      %s54 = sadd.s32 %s53, 1
      %s55 = scalar_select %p52, %s53, %s54
      %p58 = pneg %p52
      %p59 = scmp.eq.s32.totalorder %s17, 1
      %p60 = por %p58, %p59
      %p61 = scmp.ne.s32.totalorder %s53, %s56
      %p62 = scmp.eq.s32.totalorder %s17, 0
      %p63 = por %p61, %p62
      %p64 = scmp.ne.s32.totalorder %s53, %s56
      %p65 = scmp.eq.s32.totalorder %s22, 1
      %p66 = por %p64, %p65
      %p67 = scmp.ne.s32.totalorder %s56, %s57
      %p68 = scmp.eq.s32.totalorder %s22, 0
      %p69 = por %p67, %p68
      %p70 = scmp.ne.s32.totalorder %s56, %s57
      %p71 = scmp.eq.s32.totalorder %s23, 1
      %p72 = por %p70, %p71
      %p74 = scmp.ne.s32.totalorder %s57, %s73
      %p75 = scmp.eq.s32.totalorder %s23, 0
      %p76 = por %p74, %p75
      %s77 = ssub.s32 %s17, %s24
      %p78 = scmp.eq.s32.totalorder %s77, 0
      %s80 = sadd.s32 %s79, 1
      %s81 = scalar_select %p78, %s79, %s80
      %p84 = pneg %p78
      %p85 = scmp.eq.s32.totalorder %s17, 1
      %p86 = por %p84, %p85
      %p87 = scmp.ne.s32.totalorder %s79, %s82
      %p88 = scmp.eq.s32.totalorder %s17, 0
      %p89 = por %p87, %p88
      %p90 = scmp.ne.s32.totalorder %s79, %s82
      %p91 = scmp.eq.s32.totalorder %s22, 1
      %p92 = por %p90, %p91
      %p93 = scmp.ne.s32.totalorder %s82, %s83
      %p94 = scmp.eq.s32.totalorder %s22, 0
      %p95 = por %p93, %p94
      %p96 = scmp.ne.s32.totalorder %s82, %s83
      %p97 = scmp.eq.s32.totalorder %s23, 1
      %p98 = por %p96, %p97
      %p100 = scmp.ne.s32.totalorder %s83, %s99
      %p101 = scmp.eq.s32.totalorder %s23, 0
      %p102 = por %p100, %p101
      %s103 = ssub.s32 %s17, %s24
      %p104 = scmp.eq.s32.totalorder %s103, 0
      %s106 = sadd.s32 %s105, 1
      %s107 = scalar_select %p104, %s105, %s106
      %p110 = pneg %p104
      %p111 = scmp.eq.s32.totalorder %s17, 1
      %p112 = por %p110, %p111
      %p113 = scmp.ne.s32.totalorder %s105, %s108
      %p114 = scmp.eq.s32.totalorder %s17, 0
      %p115 = por %p113, %p114
      %p116 = scmp.ne.s32.totalorder %s105, %s108
      %p117 = scmp.eq.s32.totalorder %s22, 1
      %p118 = por %p116, %p117
      %p119 = scmp.ne.s32.totalorder %s108, %s109
      %p120 = scmp.eq.s32.totalorder %s22, 0
      %p121 = por %p119, %p120
      %p122 = scmp.ne.s32.totalorder %s108, %s109
      %p123 = scmp.eq.s32.totalorder %s23, 1
      %p124 = por %p122, %p123
      %p126 = scmp.ne.s32.totalorder %s109, %s125
      %p127 = scmp.eq.s32.totalorder %s23, 0
      %p128 = por %p126, %p127
      %s129 = ssub.s32 %s17, %s24
      %p130 = scmp.eq.s32.totalorder %s129, 0
      %s132 = sadd.s32 %s131, 1
      %s133 = scalar_select %p130, %s131, %s132
      %p136 = pneg %p130
      %p137 = scmp.eq.s32.totalorder %s17, 1
      %p138 = por %p136, %p137
      %p139 = scmp.ne.s32.totalorder %s131, %s134
      %p140 = scmp.eq.s32.totalorder %s17, 0
      %p141 = por %p139, %p140
      %p142 = scmp.ne.s32.totalorder %s131, %s134
      %p143 = scmp.eq.s32.totalorder %s22, 1
      %p144 = por %p142, %p143
      %p145 = scmp.ne.s32.totalorder %s134, %s135
      %p146 = scmp.eq.s32.totalorder %s22, 0
      %p147 = por %p145, %p146
      %p148 = scmp.ne.s32.totalorder %s134, %s135
      %p149 = scmp.eq.s32.totalorder %s23, 1
      %p150 = por %p148, %p149
      %p152 = scmp.ne.s32.totalorder %s135, %s151
      %p153 = scmp.eq.s32.totalorder %s23, 0
      %p154 = por %p152, %p153
      %s155 = ssub.s32 %s17, %s24
      %p156 = scmp.eq.s32.totalorder %s155, 0
      %s158 = sadd.s32 %s157, 1
      %s159 = scalar_select %p156, %s157, %s158
      %p162 = pneg %p156
      %p163 = scmp.eq.s32.totalorder %s17, 1
      %p164 = por %p162, %p163
      %p165 = scmp.ne.s32.totalorder %s157, %s160
      %p166 = scmp.eq.s32.totalorder %s17, 0
      %p167 = por %p165, %p166
      %p168 = scmp.ne.s32.totalorder %s157, %s160
      %p169 = scmp.eq.s32.totalorder %s22, 1
      %p170 = por %p168, %p169
      %p171 = scmp.ne.s32.totalorder %s160, %s161
      %p172 = scmp.eq.s32.totalorder %s22, 0
      %p173 = por %p171, %p172
      %p174 = scmp.ne.s32.totalorder %s160, %s161
      %p175 = scmp.eq.s32.totalorder %s23, 1
      %p176 = por %p174, %p175
      %p178 = scmp.ne.s32.totalorder %s161, %s177
      %p179 = scmp.eq.s32.totalorder %s23, 0
      %p180 = por %p178, %p179
      %s181 = ssub.s32 %s17, %s24
      %p182 = scmp.eq.s32.totalorder %s181, 0
      %s184 = sadd.s32 %s183, 1
      %s185 = scalar_select %p182, %s183, %s184
      %p188 = pneg %p182
      %p189 = scmp.eq.s32.totalorder %s17, 1
      %p190 = por %p188, %p189
      %p191 = scmp.ne.s32.totalorder %s183, %s186
      %p192 = scmp.eq.s32.totalorder %s17, 0
      %p193 = por %p191, %p192
      %p194 = scmp.ne.s32.totalorder %s183, %s186
      %p195 = scmp.eq.s32.totalorder %s22, 1
      %p196 = por %p194, %p195
      %p197 = scmp.ne.s32.totalorder %s186, %s187
      %p198 = scmp.eq.s32.totalorder %s22, 0
      %p199 = por %p197, %p198
      %p200 = scmp.ne.s32.totalorder %s186, %s187
      %p201 = scmp.eq.s32.totalorder %s23, 1
      %p202 = por %p200, %p201
      %p204 = scmp.ne.s32.totalorder %s187, %s203
      %p205 = scmp.eq.s32.totalorder %s23, 0
      %p206 = por %p204, %p205
      %s207 = ssub.s32 %s17, %s24
      %p208 = scmp.eq.s32.totalorder %s207, 0
      %s210 = sadd.s32 %s209, 1
      %s211 = scalar_select %p208, %s209, %s210
      %p214 = pneg %p208
      %p215 = scmp.eq.s32.totalorder %s17, 1
      %p216 = por %p214, %p215
      %p217 = scmp.ne.s32.totalorder %s209, %s212
      %p218 = scmp.eq.s32.totalorder %s17, 0
      %p219 = por %p217, %p218
      %p220 = scmp.ne.s32.totalorder %s209, %s212
      %p221 = scmp.eq.s32.totalorder %s22, 1
      %p222 = por %p220, %p221
      %p223 = scmp.ne.s32.totalorder %s212, %s213
      %p224 = scmp.eq.s32.totalorder %s22, 0
      %p225 = por %p223, %p224
      %p226 = scmp.ne.s32.totalorder %s212, %s213
      %p227 = scmp.eq.s32.totalorder %s23, 1
      %p228 = por %p226, %p227
      %p230 = scmp.ne.s32.totalorder %s213, %s229
      %p231 = scmp.eq.s32.totalorder %s23, 0
      %p232 = por %p230, %p231
      %s233 = ssub.s32 %s17, %s24
      %p234 = scmp.eq.s32.totalorder %s233, 0
      %s236 = sadd.s32 %s235, 1
      %s237 = scalar_select %p234, %s235, %s236
      %p240 = pneg %p234
      %p241 = scmp.eq.s32.totalorder %s17, 1
      %p242 = por %p240, %p241
      %p243 = scmp.ne.s32.totalorder %s235, %s238
      %p244 = scmp.eq.s32.totalorder %s17, 0
      %p245 = por %p243, %p244
      %p246 = scmp.ne.s32.totalorder %s235, %s238
      %p247 = scmp.eq.s32.totalorder %s22, 1
      %p248 = por %p246, %p247
      %p249 = scmp.ne.s32.totalorder %s238, %s239
      %p250 = scmp.eq.s32.totalorder %s22, 0
      %p251 = por %p249, %p250
      %p252 = scmp.ne.s32.totalorder %s238, %s239
      %p253 = scmp.eq.s32.totalorder %s23, 1
      %p254 = por %p252, %p253
      %p256 = scmp.ne.s32.totalorder %s239, %s255
      %p257 = scmp.eq.s32.totalorder %s23, 0
      %p258 = por %p256, %p257
      %p259 = scmp.le.s32.totalorder 1, %s17
      %p260 = scmp.lt.s32.totalorder %s17, 3
      %p261 = pnand %p259, %p260
      %p262 = pneg %p261
      // Predicated region
      $region9: #{tpu_custom_call.1} parent=5 // pred_check
        _
      $region10: #{tpu_custom_call.1} parent=5 // pred_check_branch
        %264 = sbr.rel (%p261) target = $region12
      $region11: #{tpu_custom_call.1} parent=5 // pred_region
        %s265 = ssub.s32 %s17, 1
      $region12: #{tpu_custom_call.1} parent=5 // pred_fallthru
        _
      %p266 = scmp.lt.s32.totalorder %s17, 2
      // Predicated region
      $region13: #{tpu_custom_call.1} parent=5 // pred_check
        %p267 = pneg %p266
      $region14: #{tpu_custom_call.1} parent=5 // pred_check_branch
        %269 = sbr.rel (%p267) target = $region16
      $region15: #{tpu_custom_call.1} parent=5 // pred_region
        // Predicated region
        $region17: #{tpu_custom_call.1} parent=15 // pred_check
          %p270 = pneg %p37
        $region18: #{tpu_custom_call.1} parent=15 // pred_check_branch
          %272 = sbr.rel (%p270) target = $region20
        $region19: #{tpu_custom_call.1} parent=15 // pred_region
          %p273 = scmp.lt.s32.totalorder %s17, 1
          %s274 = scalar_select %p273, %s17, 1
          %s275 = smul.addr %s274, 4
          %s276 = scalar_lea.vmem %s0, %s275
        $region20: #{tpu_custom_call.1} parent=15 // pred_fallthru
          _
        // Predicated region
        $region21: #{tpu_custom_call.1} parent=15 // pred_check
          %p277 = pneg %p63
        $region22: #{tpu_custom_call.1} parent=15 // pred_check_branch
          %279 = sbr.rel (%p277) target = $region24
        $region23: #{tpu_custom_call.1} parent=15 // pred_region
          %p280 = scmp.lt.s32.totalorder %s17, 1
          %s281 = scalar_select %p280, %s17, 1
          %s282 = smul.addr %s281, 2
          %s283 = scalar_lea.vmem %s1, %s282
        $region24: #{tpu_custom_call.1} parent=15 // pred_fallthru
          _
        // Predicated region
        $region25: #{tpu_custom_call.1} parent=15 // pred_check
          %p284 = pneg %p89
        $region26: #{tpu_custom_call.1} parent=15 // pred_check_branch
          %286 = sbr.rel (%p284) target = $region28
        $region27: #{tpu_custom_call.1} parent=15 // pred_region
          %p287 = scmp.lt.s32.totalorder %s17, 1
          %s288 = scalar_select %p287, %s17, 1
          %s289 = smul.addr %s288, 2
          %s290 = smul.addr %s289, 8
          %s291 = scalar_lea.vmem %s2, %s290
        $region28: #{tpu_custom_call.1} parent=15 // pred_fallthru
          _
        // Predicated region
        $region29: #{tpu_custom_call.1} parent=15 // pred_check
          %p292 = pneg %p115
        $region30: #{tpu_custom_call.1} parent=15 // pred_check_branch
          %294 = sbr.rel (%p292) target = $region32
        $region31: #{tpu_custom_call.1} parent=15 // pred_region
          %p295 = scmp.lt.s32.totalorder %s17, 1
          %s296 = scalar_select %p295, %s17, 1
          %s297 = smul.addr %s296, 2
          %s298 = scalar_lea.vmem %s3, %s297
        $region32: #{tpu_custom_call.1} parent=15 // pred_fallthru
          _
        // Predicated region
        $region33: #{tpu_custom_call.1} parent=15 // pred_check
          %p299 = pneg %p141
        $region34: #{tpu_custom_call.1} parent=15 // pred_check_branch
          %301 = sbr.rel (%p299) target = $region36
        $region35: #{tpu_custom_call.1} parent=15 // pred_region
          %p302 = scmp.lt.s32.totalorder %s17, 1
          %s303 = scalar_select %p302, %s17, 1
          %s304 = smul.addr %s303, 4
          %s305 = scalar_lea.vmem %s4, %s304
        $region36: #{tpu_custom_call.1} parent=15 // pred_fallthru
          _
        // Predicated region
        $region37: #{tpu_custom_call.1} parent=15 // pred_check
          %p306 = pneg %p167
        $region38: #{tpu_custom_call.1} parent=15 // pred_check_branch
          %308 = sbr.rel (%p306) target = $region40
        $region39: #{tpu_custom_call.1} parent=15 // pred_region
          %p309 = scmp.lt.s32.totalorder %s17, 1
          %s310 = scalar_select %p309, %s17, 1
          %s311 = smul.addr %s310, 2
          %s312 = smul.addr %s311, 8
          %s313 = scalar_lea.vmem %s5, %s312
        $region40: #{tpu_custom_call.1} parent=15 // pred_fallthru
          _
        // Predicated region
        $region41: #{tpu_custom_call.1} parent=15 // pred_check
          %p314 = pneg %p193
        $region42: #{tpu_custom_call.1} parent=15 // pred_check_branch
          %316 = sbr.rel (%p314) target = $region44
        $region43: #{tpu_custom_call.1} parent=15 // pred_region
          %p317 = scmp.lt.s32.totalorder %s17, 1
          %s318 = scalar_select %p317, %s17, 1
          %s319 = scalar_lea.vmem %s6, %s318
        $region44: #{tpu_custom_call.1} parent=15 // pred_fallthru
          _
        // Predicated region
        $region45: #{tpu_custom_call.1} parent=15 // pred_check
          %p320 = pneg %p219
        $region46: #{tpu_custom_call.1} parent=15 // pred_check_branch
          %322 = sbr.rel (%p320) target = $region48
        $region47: #{tpu_custom_call.1} parent=15 // pred_region
          %p323 = scmp.lt.s32.totalorder %s17, 1
          %s324 = scalar_select %p323, %s17, 1
          %s325 = scalar_lea.vmem %s7, %s324
        $region48: #{tpu_custom_call.1} parent=15 // pred_fallthru
          _
      $region16: #{tpu_custom_call.1} parent=5 // pred_fallthru
        _
      %p326 = scmp.le.s32.totalorder 1, %s17
      %p327 = scmp.lt.s32.totalorder %s17, 3
      %p328 = pnand %p326, %p327
      %p329 = pneg %p328
      // Predicated region
      $region49: #{tpu_custom_call.1} parent=5 // pred_check
        _
      $region50: #{tpu_custom_call.1} parent=5 // pred_check_branch
        %331 = sbr.rel (%p328) target = $region52
      $region51: #{tpu_custom_call.1} parent=5 // pred_region
        %s332 = ssub.s32 %s17, 1
        %p333 = scmp.lt.s32.totalorder %s22, 1
        %s334 = scalar_select %p333, %s22, 1
        %s335 = smul.addr %s334, 4
        %s336 = scalar_lea.vmem %s0, %s335
        %p337 = pneg %p43
        %p338 = pneg %p40
        %p339 = scmp.lt.s32.totalorder %s22, 1
        %s340 = scalar_select %p339, %s22, 1
        %s341 = smul.addr %s340, 2
        %s342 = scalar_lea.vmem %s1, %s341
        %p343 = pneg %p69
        %p344 = pneg %p66
        %p345 = scmp.lt.s32.totalorder %s22, 1
        %s346 = scalar_select %p345, %s22, 1
        %s347 = smul.addr %s346, 2
        %s348 = smul.addr %s347, 8
        %s349 = scalar_lea.vmem %s2, %s348
        %p350 = pneg %p95
        %p351 = pneg %p92
        %p352 = scmp.lt.s32.totalorder %s22, 1
        %s353 = scalar_select %p352, %s22, 1
        %s354 = smul.addr %s353, 2
        %s355 = scalar_lea.vmem %s3, %s354
        %p356 = pneg %p121
        %p357 = pneg %p118
        %p358 = scmp.lt.s32.totalorder %s22, 1
        %s359 = scalar_select %p358, %s22, 1
        %s360 = smul.addr %s359, 4
        %s361 = scalar_lea.vmem %s4, %s360
        %p362 = pneg %p147
        %p363 = pneg %p144
        %p364 = scmp.lt.s32.totalorder %s22, 1
        %s365 = scalar_select %p364, %s22, 1
        %s366 = smul.addr %s365, 2
        %s367 = smul.addr %s366, 8
        %s368 = scalar_lea.vmem %s5, %s367
        %p369 = pneg %p173
        %p370 = pneg %p170
        %p371 = scmp.lt.s32.totalorder %s22, 1
        %s372 = scalar_select %p371, %s22, 1
        %s373 = scalar_lea.vmem %s6, %s372
        %p374 = pneg %p199
        %p375 = pneg %p196
        %p376 = scmp.lt.s32.totalorder %s22, 1
        %s377 = scalar_select %p376, %s22, 1
        %s378 = scalar_lea.vmem %s7, %s377
        %p379 = pneg %p225
        %p380 = pneg %p222
        %p381 = pneg %p251
        %p382 = pneg %p248
        %s383 = sand.u32 %s238, 1
        %s384 = scalar_lea.sflag [#allocation3], %s383
        %s385 = sand.u32 %s238, 1
        %s386 = scalar_lea.vmem [#allocation2], %s385
        %p387 = scmp.lt.s32.totalorder %s22, 1
        %s388 = scalar_select %p387, %s22, 1
        %s389 = smul.addr %s388, 4
        %s390 = scalar_lea.vmem %s0, %s389
        %p391 = scmp.lt.s32.totalorder %s22, 1
        %s392 = scalar_select %p391, %s22, 1
        %s393 = smul.addr %s392, 2
        %s394 = scalar_lea.vmem %s1, %s393
        %p395 = scmp.lt.s32.totalorder %s22, 1
        %s396 = scalar_select %p395, %s22, 1
        %s397 = smul.addr %s396, 2
        %s398 = smul.addr %s397, 8
        %s399 = scalar_lea.vmem %s2, %s398
        %p400 = scmp.lt.s32.totalorder %s22, 1
        %s401 = scalar_select %p400, %s22, 1
        %s402 = smul.addr %s401, 2
        %s403 = scalar_lea.vmem %s3, %s402
        %p404 = scmp.lt.s32.totalorder %s22, 1
        %s405 = scalar_select %p404, %s22, 1
        %s406 = smul.addr %s405, 4
        %s407 = scalar_lea.vmem %s4, %s406
        %p408 = scmp.lt.s32.totalorder %s22, 1
        %s409 = scalar_select %p408, %s22, 1
        %s410 = smul.addr %s409, 2
        %s411 = smul.addr %s410, 8
        %s412 = scalar_lea.vmem %s5, %s411
        %p413 = scmp.lt.s32.totalorder %s22, 1
        %s414 = scalar_select %p413, %s22, 1
        %s415 = scalar_lea.vmem %s6, %s414
        %p416 = scmp.lt.s32.totalorder %s22, 1
        %s417 = scalar_select %p416, %s22, 1
        %s418 = scalar_lea.vmem %s7, %s417
        %v419 = vld [vmem:[%s415] sm:$0x1]
        %v420 = vld [vmem:[%s418] sm:$0x1]
        %v421 = vld [vmem:[%s390] sm:$0xf]
        %v422 = vld [vmem:[%s407] sm:$0xf]
        %v423 = vld [vmem:[%s399] sm:$0xff]
        %v424 = vld [vmem:[%s399 + $0x8] sm:$0x3]
        %v425 = vld [vmem:[%s412] sm:$0xff]
        %v426 = vld [vmem:[%s412 + $0x8] sm:$0x3]
        %v427 = vld [vmem:[%s394] sm:$0x3]
        %v428 = vld [vmem:[%s403] sm:$0x3]
        %vm429 = vcmp.ne.s32.totalorder %v419, 0
        %vm430 = vcmp.gt.s32.totalorder %v419, 0
        %v431 = vcvt.s32.f32 %v419
        %vm432 = vcmp.gt.f32.partialorder %v431, 0.9
        %v433 = vsub.f32 %v421, %v422
        %v434 = vand.u32 2147483647, %v433
        %vm435 = vcmp.lt.f32.partialorder %v434, 1.0
        %v436 = vmul.f32 %v433, 0.5
        %v437 = vmul.f32 %v436, %v433
        %v438 = vsub.f32 %v434, 0.5
        %v439 = vsel %vm435, %v437, %v438
        %v440 = vsel %vm429, 1, 0
        %v441 = vlaneseq
        %v442 = vshrl.u32 %v441, 7
        %v443 = vsub.s32 0, %v442
        %v444 = vrot.slane %v440, %v443
        %vm445 = vcmp.eq.s32.totalorder %v444, 1
        %v446 = vsel %vm445, %v439, 0.0
        %vm447 = vcmask 1043456
        %v448 = vsel %vm447, %v446, 0.0
        %449 = vadd.xlane.f32.xlu0 %v448
        %v450 = vpop.xlane.xlu0 %449
        %v451 = vrot.slane %v450, 4
        %v452 = vadd.f32 %v450, %v451
        %v453 = vrot.slane %v452, 2
        %v454 = vadd.f32 %v452, %v453
        %v455 = vrot.slane %v454, 1
        %v456 = vadd.f32 %v454, %v455
        %s457 = vtos %v456
        %v458 = vsub.f32 %v423, %v425
        %v459 = vsub.f32 %v424, %v426
        %v460 = vand.u32 2147483647, %v458
        %v461 = vand.u32 2147483647, %v459
        %vm462 = vcmp.lt.f32.partialorder %v460, 1.0
        %vm463 = vcmp.lt.f32.partialorder %v461, 1.0
        %v464 = vmul.f32 %v458, 0.5
        %v465 = vmul.f32 %v459, 0.5
        %v466 = vmul.f32 %v464, %v458
        %v467 = vmul.f32 %v465, %v459
        %v468 = vsub.f32 %v460, 0.5
        %v469 = vsub.f32 %v461, 0.5
        %v470 = vsel %vm462, %v466, %v468
        %v471 = vsel %vm463, %v467, %v469
        %v472 = vsel %vm430, 1, 0
        %v473 = vlaneseq
        %v474 = vshrl.u32 %v473, 7
        %v475 = vsub.s32 0, %v474
        %v476 = vrot.slane %v472, %v475
        %vm477 = vcmp.eq.s32.totalorder %v476, 1
        %v478 = vsel %vm477, %v470, 0.0
        %v479 = vsel %vm477, %v471, 0.0
        %vm480 = vcmask 1041408
        %v481 = vsel %vm480, %v479, 0.0
        %v482 = vadd.f32 %v478, %v481
        %483 = vadd.xlane.f32.xlu0 %v482
        %v484 = vpop.xlane.xlu0 %483
        %v485 = vrot.slane %v484, 4
        %v486 = vadd.f32 %v484, %v485
        %v487 = vrot.slane %v486, 2
        %v488 = vadd.f32 %v486, %v487
        %v489 = vrot.slane %v488, 1
        %v490 = vadd.f32 %v488, %v489
        %s491 = vtos %v490
        %vm492 = vcmp.eq.s32.totalorder %v420, 1
        %v494 = vrot.slane %v428, 7
        %v496 = vsub.f32 %v428, %v494
        %v497 = vrot.slane %v428, 1
        %v499 = vsub.f32 %v428, %v497
        %v502 = vunpack.c.l.s4 1966171168
        %v503 = vunpack.c.0.s8 %v502
        %v504 = vlaneseq
        %v505 = vshrl.u32 %v504, 7
        %v506 = vsub.s32 %v503, %v505
        %v507 = vrot.slane %v496, %v506
        %v508 = vcombine.high %v507, %v507
        %v510 = vunpack.c.l.s4 1966171168
        %v511 = vunpack.c.0.s8 %v510
        %v512 = vlaneseq
        %v513 = vshrl.u32 %v512, 7
        %v514 = vsub.s32 %v511, %v513
        %v515 = vrot.slane %v508, %v514
        %v517 = vsel %vm492, %v515, %v499
        %v518 = vmin.f32 %v517, 0.0
        %v519 = vand.u32 2147483647, %v517
        %v520 = vsub.f32 0.0, %v519
        %v521 = vmul.f32 %v520, 1.442695
        %v522 = vpow.pop %v521
        %v523 = vadd.f32 %v522, 1.0
        %v524 = vlog2.pop %v523
        %v525 = vmul.f32 %v524, 0.6931472
        %v526 = vsub.f32 %v518, %v525
        %v527 = vmax.f32 %v526, -100.0
        %v528 = vmul.f32 %v527, -2.0
        %v529 = vsel %vm432, %v528, 0.0
        %vm530 = vcmask 1040384
        %v531 = vsel %vm530, %v529, 0.0
        %532 = vadd.xlane.f32.xlu0 %v531
        %v533 = vpop.xlane.xlu0 %532
        %v534 = vrot.slane %v533, 4
        %v535 = vadd.f32 %v533, %v534
        %v536 = vrot.slane %v535, 2
        %v537 = vadd.f32 %v535, %v536
        %v538 = vrot.slane %v537, 1
        %v539 = vadd.f32 %v537, %v538
        %s540 = vtos %v539
        %v542 = vrot.slane %v427, 1
        %v544 = vmax.f32 %v427, %v542
        %v545 = vsub.f32 %v427, %v544
        %v546 = vmul.f32 %v545, 1.442695
        %v547 = vpow.pop %v546
        %v549 = vrot.slane %v544, 7
        %v551 = vsub.f32 %v427, %v549
        %v552 = vmul.f32 %v551, 1.442695
        %v553 = vpow.pop %v552
        %v555 = vrot.slane %v553, 1
        %v557 = vadd.f32 %v547, %v555
        %v558 = vlog2.pop %v557
        %v559 = vmul.f32 %v558, 0.6931472
        %v560 = vadd.f32 %v544, %v559
        %v562 = vunpack.c.l.s4 1966171168
        %v563 = vunpack.c.0.s8 %v562
        %v564 = vlaneseq
        %v565 = vshrl.u32 %v564, 7
        %v566 = vsub.s32 %v563, %v565
        %v567 = vrot.slane %v427, %v566
        %v568 = vcombine.high %v567, %v567
        %v570 = vunpack.c.l.s4 1966171168
        %v571 = vunpack.c.0.s8 %v570
        %v572 = vlaneseq
        %v573 = vshrl.u32 %v572, 7
        %v574 = vsub.s32 %v571, %v573
        %v575 = vrot.slane %v568, %v574
        %v577 = vsel %vm429, %v575, %v427
        %v578 = vsub.f32 %v560, %v577
        %v579 = vsel %vm429, %v578, 0.0
        %v580 = vsel %vm530, %v579, 0.0
        %581 = vadd.xlane.f32.xlu0 %v580
        %v582 = vpop.xlane.xlu0 %581
        %v583 = vrot.slane %v582, 4
        %v584 = vadd.f32 %v582, %v583
        %v585 = vrot.slane %v584, 2
        %v586 = vadd.f32 %v584, %v585
        %v587 = vrot.slane %v586, 1
        %v588 = vadd.f32 %v586, %v587
        %s589 = vtos %v588
        %v590 = vsel %vm530, %v440, 0
        %v591 = vand.u32 %v590, 65535
        %v592 = vshrl.u32 %v590, 16
        %v593 = vcvt.s32.f32 %v591
        %v594 = vcvt.s32.f32 %v592
        %595 = vadd.xlane.f32.xlu0 %v593
        %v596 = vpop.xlane.xlu0 %595
        %597 = vadd.xlane.f32.xlu0 %v594
        %v598 = vpop.xlane.xlu0 %597
        %v599 = vcvt.f32.s32 %v596
        %v600 = vcvt.f32.s32 %v598
        %v601 = vshll.u32 %v600, 16
        %v602 = vadd.s32 %v601, %v599
        %v603 = vrot.slane %v602, 4
        %v604 = vadd.s32 %v602, %v603
        %v605 = vrot.slane %v604, 2
        %v606 = vadd.s32 %v604, %v605
        %v607 = vrot.slane %v606, 1
        %v608 = vadd.s32 %v606, %v607
        %s609 = vtos %v608
        %s610 = smul.u32 %s609, 7
        %p611 = scmp.lt.s32.totalorder %s610, 127
        %s612 = scalar_select %p611, %s610, 127
        %v613 = vsel %vm429, 0.0, %v578
        %vm615 = vcmp.ge.s32.totalorder %v613, 1073741824
        %v616 = vsel %vm615, 1, 0
        %v617 = vsel %vm530, %v616, 0
        %v618 = vand.u32 %v617, 65535
        %v619 = vshrl.u32 %v617, 16
        %v620 = vcvt.s32.f32 %v618
        %v621 = vcvt.s32.f32 %v619
        %622 = vadd.xlane.f32.xlu0 %v620
        %v623 = vpop.xlane.xlu0 %622
        %624 = vadd.xlane.f32.xlu0 %v621
        %v625 = vpop.xlane.xlu0 %624
        %v626 = vcvt.f32.s32 %v623
        %v627 = vcvt.f32.s32 %v625
        %v628 = vshll.u32 %v627, 16
        %v629 = vadd.s32 %v628, %v626
        %v630 = vrot.slane %v629, 4
        %v631 = vadd.s32 %v629, %v630
        %v632 = vrot.slane %v631, 2
        %v633 = vadd.s32 %v631, %v632
        %v634 = vrot.slane %v633, 1
        %v635 = vadd.s32 %v633, %v634
        %s636 = vtos %v635
        %p637 = scmp.ge.s32.totalorder %s636, %s612
        %s638 = scalar_select %p637, 1073741824, 0
        %s639 = sor.u32 %s638, 536870912
        %v640 = vstv %s639
        %vm641 = vcmp.ge.s32.totalorder %v613, %v640
        %v642 = vsel %vm641, 1, 0
        %v643 = vsel %vm530, %v642, 0
        %v644 = vand.u32 %v643, 65535
        %v645 = vshrl.u32 %v643, 16
        %v646 = vcvt.s32.f32 %v644
        %v647 = vcvt.s32.f32 %v645
        %648 = vadd.xlane.f32.xlu0 %v646
        %v649 = vpop.xlane.xlu0 %648
        %650 = vadd.xlane.f32.xlu0 %v647
        %v651 = vpop.xlane.xlu0 %650
        %v652 = vcvt.f32.s32 %v649
        %v653 = vcvt.f32.s32 %v651
        %v654 = vshll.u32 %v653, 16
        %v655 = vadd.s32 %v654, %v652
        %v656 = vrot.slane %v655, 4
        %v657 = vadd.s32 %v655, %v656
        %v658 = vrot.slane %v657, 2
        %v659 = vadd.s32 %v657, %v658
        %v660 = vrot.slane %v659, 1
        %v661 = vadd.s32 %v659, %v660
        %s662 = vtos %v661
        %p663 = scmp.ge.s32.totalorder %s662, %s612
        %s664 = scalar_select %p663, %s639, %s638
        %s665 = sor.u32 %s664, 268435456
        %v666 = vstv %s665
        %vm667 = vcmp.ge.s32.totalorder %v613, %v666
        %v668 = vsel %vm667, 1, 0
        %v669 = vsel %vm530, %v668, 0
        %v670 = vand.u32 %v669, 65535
        %v671 = vshrl.u32 %v669, 16
        %v672 = vcvt.s32.f32 %v670
        %v673 = vcvt.s32.f32 %v671
        %674 = vadd.xlane.f32.xlu0 %v672
        %v675 = vpop.xlane.xlu0 %674
        %676 = vadd.xlane.f32.xlu0 %v673
        %v677 = vpop.xlane.xlu0 %676
        %v678 = vcvt.f32.s32 %v675
        %v679 = vcvt.f32.s32 %v677
        %v680 = vshll.u32 %v679, 16
        %v681 = vadd.s32 %v680, %v678
        %v682 = vrot.slane %v681, 4
        %v683 = vadd.s32 %v681, %v682
        %v684 = vrot.slane %v683, 2
        %v685 = vadd.s32 %v683, %v684
        %v686 = vrot.slane %v685, 1
        %v687 = vadd.s32 %v685, %v686
        %s688 = vtos %v687
        %p689 = scmp.ge.s32.totalorder %s688, %s612
        %s690 = scalar_select %p689, %s665, %s664
        %s691 = sor.u32 %s690, 134217728
        %v692 = vstv %s691
        %vm693 = vcmp.ge.s32.totalorder %v613, %v692
        %v694 = vsel %vm693, 1, 0
        %v695 = vsel %vm530, %v694, 0
        %v696 = vand.u32 %v695, 65535
        %v697 = vshrl.u32 %v695, 16
        %v698 = vcvt.s32.f32 %v696
        %v699 = vcvt.s32.f32 %v697
        %700 = vadd.xlane.f32.xlu0 %v698
        %v701 = vpop.xlane.xlu0 %700
        %702 = vadd.xlane.f32.xlu0 %v699
        %v703 = vpop.xlane.xlu0 %702
        %v704 = vcvt.f32.s32 %v701
        %v705 = vcvt.f32.s32 %v703
        %v706 = vshll.u32 %v705, 16
        %v707 = vadd.s32 %v706, %v704
        %v708 = vrot.slane %v707, 4
        %v709 = vadd.s32 %v707, %v708
        %v710 = vrot.slane %v709, 2
        %v711 = vadd.s32 %v709, %v710
        %v712 = vrot.slane %v711, 1
        %v713 = vadd.s32 %v711, %v712
        %s714 = vtos %v713
        %p715 = scmp.ge.s32.totalorder %s714, %s612
        %s716 = scalar_select %p715, %s691, %s690
        %s717 = sor.u32 %s716, 67108864
        %v718 = vstv %s717
        %vm719 = vcmp.ge.s32.totalorder %v613, %v718
        %v720 = vsel %vm719, 1, 0
        %v721 = vsel %vm530, %v720, 0
        %v722 = vand.u32 %v721, 65535
        %v723 = vshrl.u32 %v721, 16
        %v724 = vcvt.s32.f32 %v722
        %v725 = vcvt.s32.f32 %v723
        %726 = vadd.xlane.f32.xlu0 %v724
        %v727 = vpop.xlane.xlu0 %726
        %728 = vadd.xlane.f32.xlu0 %v725
        %v729 = vpop.xlane.xlu0 %728
        %v730 = vcvt.f32.s32 %v727
        %v731 = vcvt.f32.s32 %v729
        %v732 = vshll.u32 %v731, 16
        %v733 = vadd.s32 %v732, %v730
        %v734 = vrot.slane %v733, 4
        %v735 = vadd.s32 %v733, %v734
        %v736 = vrot.slane %v735, 2
        %v737 = vadd.s32 %v735, %v736
        %v738 = vrot.slane %v737, 1
        %v739 = vadd.s32 %v737, %v738
        %s740 = vtos %v739
        %p741 = scmp.ge.s32.totalorder %s740, %s612
        %s742 = scalar_select %p741, %s717, %s716
        %s743 = sor.u32 %s742, 33554432
        %v744 = vstv %s743
        %vm745 = vcmp.ge.s32.totalorder %v613, %v744
        %v746 = vsel %vm745, 1, 0
        %v747 = vsel %vm530, %v746, 0
        %v748 = vand.u32 %v747, 65535
        %v749 = vshrl.u32 %v747, 16
        %v750 = vcvt.s32.f32 %v748
        %v751 = vcvt.s32.f32 %v749
        %752 = vadd.xlane.f32.xlu0 %v750
        %v753 = vpop.xlane.xlu0 %752
        %754 = vadd.xlane.f32.xlu0 %v751
        %v755 = vpop.xlane.xlu0 %754
        %v756 = vcvt.f32.s32 %v753
        %v757 = vcvt.f32.s32 %v755
        %v758 = vshll.u32 %v757, 16
        %v759 = vadd.s32 %v758, %v756
        %v760 = vrot.slane %v759, 4
        %v761 = vadd.s32 %v759, %v760
        %v762 = vrot.slane %v761, 2
        %v763 = vadd.s32 %v761, %v762
        %v764 = vrot.slane %v763, 1
        %v765 = vadd.s32 %v763, %v764
        %s766 = vtos %v765
        %p767 = scmp.ge.s32.totalorder %s766, %s612
        %s768 = scalar_select %p767, %s743, %s742
        %s769 = sor.u32 %s768, 16777216
        %v770 = vstv %s769
        %vm771 = vcmp.ge.s32.totalorder %v613, %v770
        %v772 = vsel %vm771, 1, 0
        %v773 = vsel %vm530, %v772, 0
        %v774 = vand.u32 %v773, 65535
        %v775 = vshrl.u32 %v773, 16
        %v776 = vcvt.s32.f32 %v774
        %v777 = vcvt.s32.f32 %v775
        %778 = vadd.xlane.f32.xlu0 %v776
        %v779 = vpop.xlane.xlu0 %778
        %780 = vadd.xlane.f32.xlu0 %v777
        %v781 = vpop.xlane.xlu0 %780
        %v782 = vcvt.f32.s32 %v779
        %v783 = vcvt.f32.s32 %v781
        %v784 = vshll.u32 %v783, 16
        %v785 = vadd.s32 %v784, %v782
        %v786 = vrot.slane %v785, 4
        %v787 = vadd.s32 %v785, %v786
        %v788 = vrot.slane %v787, 2
        %v789 = vadd.s32 %v787, %v788
        %v790 = vrot.slane %v789, 1
        %v791 = vadd.s32 %v789, %v790
        %s792 = vtos %v791
        %p793 = scmp.ge.s32.totalorder %s792, %s612
        %s794 = scalar_select %p793, %s769, %s768
        %s795 = sor.u32 %s794, 8388608
        %v796 = vstv %s795
        %vm797 = vcmp.ge.s32.totalorder %v613, %v796
        %v798 = vsel %vm797, 1, 0
        %v799 = vsel %vm530, %v798, 0
        %v800 = vand.u32 %v799, 65535
        %v801 = vshrl.u32 %v799, 16
        %v802 = vcvt.s32.f32 %v800
        %v803 = vcvt.s32.f32 %v801
        %804 = vadd.xlane.f32.xlu0 %v802
        %v805 = vpop.xlane.xlu0 %804
        %806 = vadd.xlane.f32.xlu0 %v803
        %v807 = vpop.xlane.xlu0 %806
        %v808 = vcvt.f32.s32 %v805
        %v809 = vcvt.f32.s32 %v807
        %v810 = vshll.u32 %v809, 16
        %v811 = vadd.s32 %v810, %v808
        %v812 = vrot.slane %v811, 4
        %v813 = vadd.s32 %v811, %v812
        %v814 = vrot.slane %v813, 2
        %v815 = vadd.s32 %v813, %v814
        %v816 = vrot.slane %v815, 1
        %v817 = vadd.s32 %v815, %v816
        %s818 = vtos %v817
        %p819 = scmp.ge.s32.totalorder %s818, %s612
        %s820 = scalar_select %p819, %s795, %s794
        %s821 = sor.u32 %s820, 4194304
        %v822 = vstv %s821
        %vm823 = vcmp.ge.s32.totalorder %v613, %v822
        %v824 = vsel %vm823, 1, 0
        %v825 = vsel %vm530, %v824, 0
        %v826 = vand.u32 %v825, 65535
        %v827 = vshrl.u32 %v825, 16
        %v828 = vcvt.s32.f32 %v826
        %v829 = vcvt.s32.f32 %v827
        %830 = vadd.xlane.f32.xlu0 %v828
        %v831 = vpop.xlane.xlu0 %830
        %832 = vadd.xlane.f32.xlu0 %v829
        %v833 = vpop.xlane.xlu0 %832
        %v834 = vcvt.f32.s32 %v831
        %v835 = vcvt.f32.s32 %v833
        %v836 = vshll.u32 %v835, 16
        %v837 = vadd.s32 %v836, %v834
        %v838 = vrot.slane %v837, 4
        %v839 = vadd.s32 %v837, %v838
        %v840 = vrot.slane %v839, 2
        %v841 = vadd.s32 %v839, %v840
        %v842 = vrot.slane %v841, 1
        %v843 = vadd.s32 %v841, %v842
        %s844 = vtos %v843
        %p845 = scmp.ge.s32.totalorder %s844, %s612
        %s846 = scalar_select %p845, %s821, %s820
        %s847 = sor.u32 %s846, 2097152
        %v848 = vstv %s847
        %vm849 = vcmp.ge.s32.totalorder %v613, %v848
        %v850 = vsel %vm849, 1, 0
        %v851 = vsel %vm530, %v850, 0
        %v852 = vand.u32 %v851, 65535
        %v853 = vshrl.u32 %v851, 16
        %v854 = vcvt.s32.f32 %v852
        %v855 = vcvt.s32.f32 %v853
        %856 = vadd.xlane.f32.xlu0 %v854
        %v857 = vpop.xlane.xlu0 %856
        %858 = vadd.xlane.f32.xlu0 %v855
        %v859 = vpop.xlane.xlu0 %858
        %v860 = vcvt.f32.s32 %v857
        %v861 = vcvt.f32.s32 %v859
        %v862 = vshll.u32 %v861, 16
        %v863 = vadd.s32 %v862, %v860
        %v864 = vrot.slane %v863, 4
        %v865 = vadd.s32 %v863, %v864
        %v866 = vrot.slane %v865, 2
        %v867 = vadd.s32 %v865, %v866
        %v868 = vrot.slane %v867, 1
        %v869 = vadd.s32 %v867, %v868
        %s870 = vtos %v869
        %p871 = scmp.ge.s32.totalorder %s870, %s612
        %s872 = scalar_select %p871, %s847, %s846
        %s873 = sor.u32 %s872, 1048576
        %v874 = vstv %s873
        %vm875 = vcmp.ge.s32.totalorder %v613, %v874
        %v876 = vsel %vm875, 1, 0
        %v877 = vsel %vm530, %v876, 0
        %v878 = vand.u32 %v877, 65535
        %v879 = vshrl.u32 %v877, 16
        %v880 = vcvt.s32.f32 %v878
        %v881 = vcvt.s32.f32 %v879
        %882 = vadd.xlane.f32.xlu0 %v880
        %v883 = vpop.xlane.xlu0 %882
        %884 = vadd.xlane.f32.xlu0 %v881
        %v885 = vpop.xlane.xlu0 %884
        %v886 = vcvt.f32.s32 %v883
        %v887 = vcvt.f32.s32 %v885
        %v888 = vshll.u32 %v887, 16
        %v889 = vadd.s32 %v888, %v886
        %v890 = vrot.slane %v889, 4
        %v891 = vadd.s32 %v889, %v890
        %v892 = vrot.slane %v891, 2
        %v893 = vadd.s32 %v891, %v892
        %v894 = vrot.slane %v893, 1
        %v895 = vadd.s32 %v893, %v894
        %s896 = vtos %v895
        %p897 = scmp.ge.s32.totalorder %s896, %s612
        %s898 = scalar_select %p897, %s873, %s872
        %s899 = sor.u32 %s898, 524288
        %v900 = vstv %s899
        %vm901 = vcmp.ge.s32.totalorder %v613, %v900
        %v902 = vsel %vm901, 1, 0
        %v903 = vsel %vm530, %v902, 0
        %v904 = vand.u32 %v903, 65535
        %v905 = vshrl.u32 %v903, 16
        %v906 = vcvt.s32.f32 %v904
        %v907 = vcvt.s32.f32 %v905
        %908 = vadd.xlane.f32.xlu0 %v906
        %v909 = vpop.xlane.xlu0 %908
        %910 = vadd.xlane.f32.xlu0 %v907
        %v911 = vpop.xlane.xlu0 %910
        %v912 = vcvt.f32.s32 %v909
        %v913 = vcvt.f32.s32 %v911
        %v914 = vshll.u32 %v913, 16
        %v915 = vadd.s32 %v914, %v912
        %v916 = vrot.slane %v915, 4
        %v917 = vadd.s32 %v915, %v916
        %v918 = vrot.slane %v917, 2
        %v919 = vadd.s32 %v917, %v918
        %v920 = vrot.slane %v919, 1
        %v921 = vadd.s32 %v919, %v920
        %s922 = vtos %v921
        %p923 = scmp.ge.s32.totalorder %s922, %s612
        %s924 = scalar_select %p923, %s899, %s898
        %s925 = sor.u32 %s924, 262144
        %v926 = vstv %s925
        %vm927 = vcmp.ge.s32.totalorder %v613, %v926
        %v928 = vsel %vm927, 1, 0
        %v929 = vsel %vm530, %v928, 0
        %v930 = vand.u32 %v929, 65535
        %v931 = vshrl.u32 %v929, 16
        %v932 = vcvt.s32.f32 %v930
        %v933 = vcvt.s32.f32 %v931
        %934 = vadd.xlane.f32.xlu0 %v932
        %v935 = vpop.xlane.xlu0 %934
        %936 = vadd.xlane.f32.xlu0 %v933
        %v937 = vpop.xlane.xlu0 %936
        %v938 = vcvt.f32.s32 %v935
        %v939 = vcvt.f32.s32 %v937
        %v940 = vshll.u32 %v939, 16
        %v941 = vadd.s32 %v940, %v938
        %v942 = vrot.slane %v941, 4
        %v943 = vadd.s32 %v941, %v942
        %v944 = vrot.slane %v943, 2
        %v945 = vadd.s32 %v943, %v944
        %v946 = vrot.slane %v945, 1
        %v947 = vadd.s32 %v945, %v946
        %s948 = vtos %v947
        %p949 = scmp.ge.s32.totalorder %s948, %s612
        %s950 = scalar_select %p949, %s925, %s924
        %s951 = sor.u32 %s950, 131072
        %v952 = vstv %s951
        %vm953 = vcmp.ge.s32.totalorder %v613, %v952
        %v954 = vsel %vm953, 1, 0
        %v955 = vsel %vm530, %v954, 0
        %v956 = vand.u32 %v955, 65535
        %v957 = vshrl.u32 %v955, 16
        %v958 = vcvt.s32.f32 %v956
        %v959 = vcvt.s32.f32 %v957
        %960 = vadd.xlane.f32.xlu0 %v958
        %v961 = vpop.xlane.xlu0 %960
        %962 = vadd.xlane.f32.xlu0 %v959
        %v963 = vpop.xlane.xlu0 %962
        %v964 = vcvt.f32.s32 %v961
        %v965 = vcvt.f32.s32 %v963
        %v966 = vshll.u32 %v965, 16
        %v967 = vadd.s32 %v966, %v964
        %v968 = vrot.slane %v967, 4
        %v969 = vadd.s32 %v967, %v968
        %v970 = vrot.slane %v969, 2
        %v971 = vadd.s32 %v969, %v970
        %v972 = vrot.slane %v971, 1
        %v973 = vadd.s32 %v971, %v972
        %s974 = vtos %v973
        %p975 = scmp.ge.s32.totalorder %s974, %s612
        %s976 = scalar_select %p975, %s951, %s950
        %s977 = sor.u32 %s976, 65536
        %v978 = vstv %s977
        %vm979 = vcmp.ge.s32.totalorder %v613, %v978
        %v980 = vsel %vm979, 1, 0
        %v981 = vsel %vm530, %v980, 0
        %v982 = vand.u32 %v981, 65535
        %v983 = vshrl.u32 %v981, 16
        %v984 = vcvt.s32.f32 %v982
        %v985 = vcvt.s32.f32 %v983
        %986 = vadd.xlane.f32.xlu0 %v984
        %v987 = vpop.xlane.xlu0 %986
        %988 = vadd.xlane.f32.xlu0 %v985
        %v989 = vpop.xlane.xlu0 %988
        %v990 = vcvt.f32.s32 %v987
        %v991 = vcvt.f32.s32 %v989
        %v992 = vshll.u32 %v991, 16
        %v993 = vadd.s32 %v992, %v990
        %v994 = vrot.slane %v993, 4
        %v995 = vadd.s32 %v993, %v994
        %v996 = vrot.slane %v995, 2
        %v997 = vadd.s32 %v995, %v996
        %v998 = vrot.slane %v997, 1
        %v999 = vadd.s32 %v997, %v998
        %s1000 = vtos %v999
        %p1001 = scmp.ge.s32.totalorder %s1000, %s612
        %s1002 = scalar_select %p1001, %s977, %s976
        %s1003 = sor.u32 %s1002, 32768
        %v1004 = vstv %s1003
        %vm1005 = vcmp.ge.s32.totalorder %v613, %v1004
        %v1006 = vsel %vm1005, 1, 0
        %v1007 = vsel %vm530, %v1006, 0
        %v1008 = vand.u32 %v1007, 65535
        %v1009 = vshrl.u32 %v1007, 16
        %v1010 = vcvt.s32.f32 %v1008
        %v1011 = vcvt.s32.f32 %v1009
        %1012 = vadd.xlane.f32.xlu0 %v1010
        %v1013 = vpop.xlane.xlu0 %1012
        %1014 = vadd.xlane.f32.xlu0 %v1011
        %v1015 = vpop.xlane.xlu0 %1014
        %v1016 = vcvt.f32.s32 %v1013
        %v1017 = vcvt.f32.s32 %v1015
        %v1018 = vshll.u32 %v1017, 16
        %v1019 = vadd.s32 %v1018, %v1016
        %v1020 = vrot.slane %v1019, 4
        %v1021 = vadd.s32 %v1019, %v1020
        %v1022 = vrot.slane %v1021, 2
        %v1023 = vadd.s32 %v1021, %v1022
        %v1024 = vrot.slane %v1023, 1
        %v1025 = vadd.s32 %v1023, %v1024
        %s1026 = vtos %v1025
        %p1027 = scmp.ge.s32.totalorder %s1026, %s612
        %s1028 = scalar_select %p1027, %s1003, %s1002
        %s1029 = sor.u32 %s1028, 16384
        %v1030 = vstv %s1029
        %vm1031 = vcmp.ge.s32.totalorder %v613, %v1030
        %v1032 = vsel %vm1031, 1, 0
        %v1033 = vsel %vm530, %v1032, 0
        %v1034 = vand.u32 %v1033, 65535
        %v1035 = vshrl.u32 %v1033, 16
        %v1036 = vcvt.s32.f32 %v1034
        %v1037 = vcvt.s32.f32 %v1035
        %1038 = vadd.xlane.f32.xlu0 %v1036
        %v1039 = vpop.xlane.xlu0 %1038
        %1040 = vadd.xlane.f32.xlu0 %v1037
        %v1041 = vpop.xlane.xlu0 %1040
        %v1042 = vcvt.f32.s32 %v1039
        %v1043 = vcvt.f32.s32 %v1041
        %v1044 = vshll.u32 %v1043, 16
        %v1045 = vadd.s32 %v1044, %v1042
        %v1046 = vrot.slane %v1045, 4
        %v1047 = vadd.s32 %v1045, %v1046
        %v1048 = vrot.slane %v1047, 2
        %v1049 = vadd.s32 %v1047, %v1048
        %v1050 = vrot.slane %v1049, 1
        %v1051 = vadd.s32 %v1049, %v1050
        %s1052 = vtos %v1051
        %p1053 = scmp.ge.s32.totalorder %s1052, %s612
        %s1054 = scalar_select %p1053, %s1029, %s1028
        %s1055 = sor.u32 %s1054, 8192
        %v1056 = vstv %s1055
        %vm1057 = vcmp.ge.s32.totalorder %v613, %v1056
        %v1058 = vsel %vm1057, 1, 0
        %v1059 = vsel %vm530, %v1058, 0
        %v1060 = vand.u32 %v1059, 65535
        %v1061 = vshrl.u32 %v1059, 16
        %v1062 = vcvt.s32.f32 %v1060
        %v1063 = vcvt.s32.f32 %v1061
        %1064 = vadd.xlane.f32.xlu0 %v1062
        %v1065 = vpop.xlane.xlu0 %1064
        %1066 = vadd.xlane.f32.xlu0 %v1063
        %v1067 = vpop.xlane.xlu0 %1066
        %v1068 = vcvt.f32.s32 %v1065
        %v1069 = vcvt.f32.s32 %v1067
        %v1070 = vshll.u32 %v1069, 16
        %v1071 = vadd.s32 %v1070, %v1068
        %v1072 = vrot.slane %v1071, 4
        %v1073 = vadd.s32 %v1071, %v1072
        %v1074 = vrot.slane %v1073, 2
        %v1075 = vadd.s32 %v1073, %v1074
        %v1076 = vrot.slane %v1075, 1
        %v1077 = vadd.s32 %v1075, %v1076
        %s1078 = vtos %v1077
        %p1079 = scmp.ge.s32.totalorder %s1078, %s612
        %s1080 = scalar_select %p1079, %s1055, %s1054
        %s1081 = sor.u32 %s1080, 4096
        %v1082 = vstv %s1081
        %vm1083 = vcmp.ge.s32.totalorder %v613, %v1082
        %v1084 = vsel %vm1083, 1, 0
        %v1085 = vsel %vm530, %v1084, 0
        %v1086 = vand.u32 %v1085, 65535
        %v1087 = vshrl.u32 %v1085, 16
        %v1088 = vcvt.s32.f32 %v1086
        %v1089 = vcvt.s32.f32 %v1087
        %1090 = vadd.xlane.f32.xlu0 %v1088
        %v1091 = vpop.xlane.xlu0 %1090
        %1092 = vadd.xlane.f32.xlu0 %v1089
        %v1093 = vpop.xlane.xlu0 %1092
        %v1094 = vcvt.f32.s32 %v1091
        %v1095 = vcvt.f32.s32 %v1093
        %v1096 = vshll.u32 %v1095, 16
        %v1097 = vadd.s32 %v1096, %v1094
        %v1098 = vrot.slane %v1097, 4
        %v1099 = vadd.s32 %v1097, %v1098
        %v1100 = vrot.slane %v1099, 2
        %v1101 = vadd.s32 %v1099, %v1100
        %v1102 = vrot.slane %v1101, 1
        %v1103 = vadd.s32 %v1101, %v1102
        %s1104 = vtos %v1103
        %p1105 = scmp.ge.s32.totalorder %s1104, %s612
        %s1106 = scalar_select %p1105, %s1081, %s1080
        %s1107 = sor.u32 %s1106, 2048
        %v1108 = vstv %s1107
        %vm1109 = vcmp.ge.s32.totalorder %v613, %v1108
        %v1110 = vsel %vm1109, 1, 0
        %v1111 = vsel %vm530, %v1110, 0
        %v1112 = vand.u32 %v1111, 65535
        %v1113 = vshrl.u32 %v1111, 16
        %v1114 = vcvt.s32.f32 %v1112
        %v1115 = vcvt.s32.f32 %v1113
        %1116 = vadd.xlane.f32.xlu0 %v1114
        %v1117 = vpop.xlane.xlu0 %1116
        %1118 = vadd.xlane.f32.xlu0 %v1115
        %v1119 = vpop.xlane.xlu0 %1118
        %v1120 = vcvt.f32.s32 %v1117
        %v1121 = vcvt.f32.s32 %v1119
        %v1122 = vshll.u32 %v1121, 16
        %v1123 = vadd.s32 %v1122, %v1120
        %v1124 = vrot.slane %v1123, 4
        %v1125 = vadd.s32 %v1123, %v1124
        %v1126 = vrot.slane %v1125, 2
        %v1127 = vadd.s32 %v1125, %v1126
        %v1128 = vrot.slane %v1127, 1
        %v1129 = vadd.s32 %v1127, %v1128
        %s1130 = vtos %v1129
        %p1131 = scmp.ge.s32.totalorder %s1130, %s612
        %s1132 = scalar_select %p1131, %s1107, %s1106
        %s1133 = sor.u32 %s1132, 1024
        %v1134 = vstv %s1133
        %vm1135 = vcmp.ge.s32.totalorder %v613, %v1134
        %v1136 = vsel %vm1135, 1, 0
        %v1137 = vsel %vm530, %v1136, 0
        %v1138 = vand.u32 %v1137, 65535
        %v1139 = vshrl.u32 %v1137, 16
        %v1140 = vcvt.s32.f32 %v1138
        %v1141 = vcvt.s32.f32 %v1139
        %1142 = vadd.xlane.f32.xlu0 %v1140
        %v1143 = vpop.xlane.xlu0 %1142
        %1144 = vadd.xlane.f32.xlu0 %v1141
        %v1145 = vpop.xlane.xlu0 %1144
        %v1146 = vcvt.f32.s32 %v1143
        %v1147 = vcvt.f32.s32 %v1145
        %v1148 = vshll.u32 %v1147, 16
        %v1149 = vadd.s32 %v1148, %v1146
        %v1150 = vrot.slane %v1149, 4
        %v1151 = vadd.s32 %v1149, %v1150
        %v1152 = vrot.slane %v1151, 2
        %v1153 = vadd.s32 %v1151, %v1152
        %v1154 = vrot.slane %v1153, 1
        %v1155 = vadd.s32 %v1153, %v1154
        %s1156 = vtos %v1155
        %p1157 = scmp.ge.s32.totalorder %s1156, %s612
        %s1158 = scalar_select %p1157, %s1133, %s1132
        %s1159 = sor.u32 %s1158, 512
        %v1160 = vstv %s1159
        %vm1161 = vcmp.ge.s32.totalorder %v613, %v1160
        %v1162 = vsel %vm1161, 1, 0
        %v1163 = vsel %vm530, %v1162, 0
        %v1164 = vand.u32 %v1163, 65535
        %v1165 = vshrl.u32 %v1163, 16
        %v1166 = vcvt.s32.f32 %v1164
        %v1167 = vcvt.s32.f32 %v1165
        %1168 = vadd.xlane.f32.xlu0 %v1166
        %v1169 = vpop.xlane.xlu0 %1168
        %1170 = vadd.xlane.f32.xlu0 %v1167
        %v1171 = vpop.xlane.xlu0 %1170
        %v1172 = vcvt.f32.s32 %v1169
        %v1173 = vcvt.f32.s32 %v1171
        %v1174 = vshll.u32 %v1173, 16
        %v1175 = vadd.s32 %v1174, %v1172
        %v1176 = vrot.slane %v1175, 4
        %v1177 = vadd.s32 %v1175, %v1176
        %v1178 = vrot.slane %v1177, 2
        %v1179 = vadd.s32 %v1177, %v1178
        %v1180 = vrot.slane %v1179, 1
        %v1181 = vadd.s32 %v1179, %v1180
        %s1182 = vtos %v1181
        %p1183 = scmp.ge.s32.totalorder %s1182, %s612
        %s1184 = scalar_select %p1183, %s1159, %s1158
        %s1185 = sor.u32 %s1184, 256
        %v1186 = vstv %s1185
        %vm1187 = vcmp.ge.s32.totalorder %v613, %v1186
        %v1188 = vsel %vm1187, 1, 0
        %v1189 = vsel %vm530, %v1188, 0
        %v1190 = vand.u32 %v1189, 65535
        %v1191 = vshrl.u32 %v1189, 16
        %v1192 = vcvt.s32.f32 %v1190
        %v1193 = vcvt.s32.f32 %v1191
        %1194 = vadd.xlane.f32.xlu0 %v1192
        %v1195 = vpop.xlane.xlu0 %1194
        %1196 = vadd.xlane.f32.xlu0 %v1193
        %v1197 = vpop.xlane.xlu0 %1196
        %v1198 = vcvt.f32.s32 %v1195
        %v1199 = vcvt.f32.s32 %v1197
        %v1200 = vshll.u32 %v1199, 16
        %v1201 = vadd.s32 %v1200, %v1198
        %v1202 = vrot.slane %v1201, 4
        %v1203 = vadd.s32 %v1201, %v1202
        %v1204 = vrot.slane %v1203, 2
        %v1205 = vadd.s32 %v1203, %v1204
        %v1206 = vrot.slane %v1205, 1
        %v1207 = vadd.s32 %v1205, %v1206
        %s1208 = vtos %v1207
        %p1209 = scmp.ge.s32.totalorder %s1208, %s612
        %s1210 = scalar_select %p1209, %s1185, %s1184
        %s1211 = sor.u32 %s1210, 128
        %v1212 = vstv %s1211
        %vm1213 = vcmp.ge.s32.totalorder %v613, %v1212
        %v1214 = vsel %vm1213, 1, 0
        %v1215 = vsel %vm530, %v1214, 0
        %v1216 = vand.u32 %v1215, 65535
        %v1217 = vshrl.u32 %v1215, 16
        %v1218 = vcvt.s32.f32 %v1216
        %v1219 = vcvt.s32.f32 %v1217
        %1220 = vadd.xlane.f32.xlu0 %v1218
        %v1221 = vpop.xlane.xlu0 %1220
        %1222 = vadd.xlane.f32.xlu0 %v1219
        %v1223 = vpop.xlane.xlu0 %1222
        %v1224 = vcvt.f32.s32 %v1221
        %v1225 = vcvt.f32.s32 %v1223
        %v1226 = vshll.u32 %v1225, 16
        %v1227 = vadd.s32 %v1226, %v1224
        %v1228 = vrot.slane %v1227, 4
        %v1229 = vadd.s32 %v1227, %v1228
        %v1230 = vrot.slane %v1229, 2
        %v1231 = vadd.s32 %v1229, %v1230
        %v1232 = vrot.slane %v1231, 1
        %v1233 = vadd.s32 %v1231, %v1232
        %s1234 = vtos %v1233
        %p1235 = scmp.ge.s32.totalorder %s1234, %s612
        %s1236 = scalar_select %p1235, %s1211, %s1210
        %s1237 = sor.u32 %s1236, 64
        %v1238 = vstv %s1237
        %vm1239 = vcmp.ge.s32.totalorder %v613, %v1238
        %v1240 = vsel %vm1239, 1, 0
        %v1241 = vsel %vm530, %v1240, 0
        %v1242 = vand.u32 %v1241, 65535
        %v1243 = vshrl.u32 %v1241, 16
        %v1244 = vcvt.s32.f32 %v1242
        %v1245 = vcvt.s32.f32 %v1243
        %1246 = vadd.xlane.f32.xlu0 %v1244
        %v1247 = vpop.xlane.xlu0 %1246
        %1248 = vadd.xlane.f32.xlu0 %v1245
        %v1249 = vpop.xlane.xlu0 %1248
        %v1250 = vcvt.f32.s32 %v1247
        %v1251 = vcvt.f32.s32 %v1249
        %v1252 = vshll.u32 %v1251, 16
        %v1253 = vadd.s32 %v1252, %v1250
        %v1254 = vrot.slane %v1253, 4
        %v1255 = vadd.s32 %v1253, %v1254
        %v1256 = vrot.slane %v1255, 2
        %v1257 = vadd.s32 %v1255, %v1256
        %v1258 = vrot.slane %v1257, 1
        %v1259 = vadd.s32 %v1257, %v1258
        %s1260 = vtos %v1259
        %p1261 = scmp.ge.s32.totalorder %s1260, %s612
        %s1262 = scalar_select %p1261, %s1237, %s1236
        %s1263 = sor.u32 %s1262, 32
        %v1264 = vstv %s1263
        %vm1265 = vcmp.ge.s32.totalorder %v613, %v1264
        %v1266 = vsel %vm1265, 1, 0
        %v1267 = vsel %vm530, %v1266, 0
        %v1268 = vand.u32 %v1267, 65535
        %v1269 = vshrl.u32 %v1267, 16
        %v1270 = vcvt.s32.f32 %v1268
        %v1271 = vcvt.s32.f32 %v1269
        %1272 = vadd.xlane.f32.xlu0 %v1270
        %v1273 = vpop.xlane.xlu0 %1272
        %1274 = vadd.xlane.f32.xlu0 %v1271
        %v1275 = vpop.xlane.xlu0 %1274
        %v1276 = vcvt.f32.s32 %v1273
        %v1277 = vcvt.f32.s32 %v1275
        %v1278 = vshll.u32 %v1277, 16
        %v1279 = vadd.s32 %v1278, %v1276
        %v1280 = vrot.slane %v1279, 4
        %v1281 = vadd.s32 %v1279, %v1280
        %v1282 = vrot.slane %v1281, 2
        %v1283 = vadd.s32 %v1281, %v1282
        %v1284 = vrot.slane %v1283, 1
        %v1285 = vadd.s32 %v1283, %v1284
        %s1286 = vtos %v1285
        %p1287 = scmp.ge.s32.totalorder %s1286, %s612
        %s1288 = scalar_select %p1287, %s1263, %s1262
        %s1289 = sor.u32 %s1288, 16
        %v1290 = vstv %s1289
        %vm1291 = vcmp.ge.s32.totalorder %v613, %v1290
        %v1292 = vsel %vm1291, 1, 0
        %v1293 = vsel %vm530, %v1292, 0
        %v1294 = vand.u32 %v1293, 65535
        %v1295 = vshrl.u32 %v1293, 16
        %v1296 = vcvt.s32.f32 %v1294
        %v1297 = vcvt.s32.f32 %v1295
        %1298 = vadd.xlane.f32.xlu0 %v1296
        %v1299 = vpop.xlane.xlu0 %1298
        %1300 = vadd.xlane.f32.xlu0 %v1297
        %v1301 = vpop.xlane.xlu0 %1300
        %v1302 = vcvt.f32.s32 %v1299
        %v1303 = vcvt.f32.s32 %v1301
        %v1304 = vshll.u32 %v1303, 16
        %v1305 = vadd.s32 %v1304, %v1302
        %v1306 = vrot.slane %v1305, 4
        %v1307 = vadd.s32 %v1305, %v1306
        %v1308 = vrot.slane %v1307, 2
        %v1309 = vadd.s32 %v1307, %v1308
        %v1310 = vrot.slane %v1309, 1
        %v1311 = vadd.s32 %v1309, %v1310
        %s1312 = vtos %v1311
        %p1313 = scmp.ge.s32.totalorder %s1312, %s612
        %s1314 = scalar_select %p1313, %s1289, %s1288
        %s1315 = sor.u32 %s1314, 8
        %v1316 = vstv %s1315
        %vm1317 = vcmp.ge.s32.totalorder %v613, %v1316
        %v1318 = vsel %vm1317, 1, 0
        %v1319 = vsel %vm530, %v1318, 0
        %v1320 = vand.u32 %v1319, 65535
        %v1321 = vshrl.u32 %v1319, 16
        %v1322 = vcvt.s32.f32 %v1320
        %v1323 = vcvt.s32.f32 %v1321
        %1324 = vadd.xlane.f32.xlu0 %v1322
        %v1325 = vpop.xlane.xlu0 %1324
        %1326 = vadd.xlane.f32.xlu0 %v1323
        %v1327 = vpop.xlane.xlu0 %1326
        %v1328 = vcvt.f32.s32 %v1325
        %v1329 = vcvt.f32.s32 %v1327
        %v1330 = vshll.u32 %v1329, 16
        %v1331 = vadd.s32 %v1330, %v1328
        %v1332 = vrot.slane %v1331, 4
        %v1333 = vadd.s32 %v1331, %v1332
        %v1334 = vrot.slane %v1333, 2
        %v1335 = vadd.s32 %v1333, %v1334
        %v1336 = vrot.slane %v1335, 1
        %v1337 = vadd.s32 %v1335, %v1336
        %s1338 = vtos %v1337
        %p1339 = scmp.ge.s32.totalorder %s1338, %s612
        %s1340 = scalar_select %p1339, %s1315, %s1314
        %s1341 = sor.u32 %s1340, 4
        %v1342 = vstv %s1341
        %vm1343 = vcmp.ge.s32.totalorder %v613, %v1342
        %v1344 = vsel %vm1343, 1, 0
        %v1345 = vsel %vm530, %v1344, 0
        %v1346 = vand.u32 %v1345, 65535
        %v1347 = vshrl.u32 %v1345, 16
        %v1348 = vcvt.s32.f32 %v1346
        %v1349 = vcvt.s32.f32 %v1347
        %1350 = vadd.xlane.f32.xlu0 %v1348
        %v1351 = vpop.xlane.xlu0 %1350
        %1352 = vadd.xlane.f32.xlu0 %v1349
        %v1353 = vpop.xlane.xlu0 %1352
        %v1354 = vcvt.f32.s32 %v1351
        %v1355 = vcvt.f32.s32 %v1353
        %v1356 = vshll.u32 %v1355, 16
        %v1357 = vadd.s32 %v1356, %v1354
        %v1358 = vrot.slane %v1357, 4
        %v1359 = vadd.s32 %v1357, %v1358
        %v1360 = vrot.slane %v1359, 2
        %v1361 = vadd.s32 %v1359, %v1360
        %v1362 = vrot.slane %v1361, 1
        %v1363 = vadd.s32 %v1361, %v1362
        %s1364 = vtos %v1363
        %p1365 = scmp.ge.s32.totalorder %s1364, %s612
        %s1366 = scalar_select %p1365, %s1341, %s1340
        %s1367 = sor.u32 %s1366, 2
        %v1368 = vstv %s1367
        %vm1369 = vcmp.ge.s32.totalorder %v613, %v1368
        %v1370 = vsel %vm1369, 1, 0
        %v1371 = vsel %vm530, %v1370, 0
        %v1372 = vand.u32 %v1371, 65535
        %v1373 = vshrl.u32 %v1371, 16
        %v1374 = vcvt.s32.f32 %v1372
        %v1375 = vcvt.s32.f32 %v1373
        %1376 = vadd.xlane.f32.xlu0 %v1374
        %v1377 = vpop.xlane.xlu0 %1376
        %1378 = vadd.xlane.f32.xlu0 %v1375
        %v1379 = vpop.xlane.xlu0 %1378
        %v1380 = vcvt.f32.s32 %v1377
        %v1381 = vcvt.f32.s32 %v1379
        %v1382 = vshll.u32 %v1381, 16
        %v1383 = vadd.s32 %v1382, %v1380
        %v1384 = vrot.slane %v1383, 4
        %v1385 = vadd.s32 %v1383, %v1384
        %v1386 = vrot.slane %v1385, 2
        %v1387 = vadd.s32 %v1385, %v1386
        %v1388 = vrot.slane %v1387, 1
        %v1389 = vadd.s32 %v1387, %v1388
        %s1390 = vtos %v1389
        %p1391 = scmp.ge.s32.totalorder %s1390, %s612
        %s1392 = scalar_select %p1391, %s1367, %s1366
        %s1393 = sor.u32 %s1392, 1
        %v1394 = vstv %s1393
        %vm1395 = vcmp.ge.s32.totalorder %v613, %v1394
        %v1396 = vsel %vm1395, 1, 0
        %v1397 = vsel %vm530, %v1396, 0
        %v1398 = vand.u32 %v1397, 65535
        %v1399 = vshrl.u32 %v1397, 16
        %v1400 = vcvt.s32.f32 %v1398
        %v1401 = vcvt.s32.f32 %v1399
        %1402 = vadd.xlane.f32.xlu0 %v1400
        %v1403 = vpop.xlane.xlu0 %1402
        %1404 = vadd.xlane.f32.xlu0 %v1401
        %v1405 = vpop.xlane.xlu0 %1404
        %v1406 = vcvt.f32.s32 %v1403
        %v1407 = vcvt.f32.s32 %v1405
        %v1408 = vshll.u32 %v1407, 16
        %v1409 = vadd.s32 %v1408, %v1406
        %v1410 = vrot.slane %v1409, 4
        %v1411 = vadd.s32 %v1409, %v1410
        %v1412 = vrot.slane %v1411, 2
        %v1413 = vadd.s32 %v1411, %v1412
        %v1414 = vrot.slane %v1413, 1
        %v1415 = vadd.s32 %v1413, %v1414
        %s1416 = vtos %v1415
        %p1417 = scmp.ge.s32.totalorder %s1416, %s612
        %s1418 = scalar_select %p1417, %s1393, %s1392
        %v1419 = vstv %s1418
        %vm1420 = vcmp.gt.s32.totalorder %v613, %v1419
        %v1421 = vsel %vm1420, 1, 0
        %v1422 = vsel %vm530, %v1421, 0
        %v1423 = vand.u32 %v1422, 65535
        %v1424 = vshrl.u32 %v1422, 16
        %v1425 = vcvt.s32.f32 %v1423
        %v1426 = vcvt.s32.f32 %v1424
        %1427 = vadd.xlane.f32.xlu0 %v1425
        %v1428 = vpop.xlane.xlu0 %1427
        %1429 = vadd.xlane.f32.xlu0 %v1426
        %v1430 = vpop.xlane.xlu0 %1429
        %v1431 = vcvt.f32.s32 %v1428
        %v1432 = vcvt.f32.s32 %v1430
        %v1433 = vshll.u32 %v1432, 16
        %v1434 = vadd.s32 %v1433, %v1431
        %v1435 = vrot.slane %v1434, 4
        %v1436 = vadd.s32 %v1434, %v1435
        %v1437 = vrot.slane %v1436, 2
        %v1438 = vadd.s32 %v1436, %v1437
        %v1439 = vrot.slane %v1438, 1
        %v1440 = vadd.s32 %v1438, %v1439
        %s1441 = vtos %v1440
        %v1442 = vsel %vm1420, %v613, 0.0
        %v1443 = vsel %vm530, %v1442, 0.0
        %1444 = vadd.xlane.f32.xlu0 %v1443
        %v1445 = vpop.xlane.xlu0 %1444
        %v1446 = vrot.slane %v1445, 4
        %v1447 = vadd.f32 %v1445, %v1446
        %v1448 = vrot.slane %v1447, 2
        %v1449 = vadd.f32 %v1447, %v1448
        %v1450 = vrot.slane %v1449, 1
        %v1451 = vadd.f32 %v1449, %v1450
        %s1452 = vtos %v1451
        %vm1453 = vcmp.eq.s32.totalorder %v613, %v1419
        %v1454 = vsel %vm1453, %v613, 0.0
        %v1455 = vsel %vm530, %v1454, -inf
        %1456 = vmax.xlane.f32.xlu0 %v1455
        %v1457 = vpop.xlane.xlu0 %1456
        %v1458 = vrot.slane %v1457, 4
        %v1459 = vmax.f32 %v1457, %v1458
        %v1460 = vrot.slane %v1459, 2
        %v1461 = vmax.f32 %v1459, %v1460
        %v1462 = vrot.slane %v1461, 1
        %v1463 = vmax.f32 %v1461, %v1462
        %s1464 = vtos %v1463
        %s1465 = ssub.s32 %s612, %s1441
        %s1466 = scvt.s32.f32 %s1465
        %s1467 = smul.f32 %s1466, %s1464
        %s1468 = sadd.f32 %s1452, %s1467
        %p1469 = scmp.gt.s32.totalorder %s612, 0
        %s1470 = scalar_select %p1469, %s1468, 0.0
        %s1471 = sadd.f32 %s589, %s1470
        %s1472 = scvt.s32.f32 %s609
        %v1473 = vsel %vm530, %v472, 0
        %v1474 = vand.u32 %v1473, 65535
        %v1475 = vshrl.u32 %v1473, 16
        %v1476 = vcvt.s32.f32 %v1474
        %v1477 = vcvt.s32.f32 %v1475
        %1478 = vadd.xlane.f32.xlu0 %v1476
        %v1479 = vpop.xlane.xlu0 %1478
        %1480 = vadd.xlane.f32.xlu0 %v1477
        %v1481 = vpop.xlane.xlu0 %1480
        %v1482 = vcvt.f32.s32 %v1479
        %v1483 = vcvt.f32.s32 %v1481
        %v1484 = vshll.u32 %v1483, 16
        %v1485 = vadd.s32 %v1484, %v1482
        %v1486 = vrot.slane %v1485, 4
        %v1487 = vadd.s32 %v1485, %v1486
        %v1488 = vrot.slane %v1487, 2
        %v1489 = vadd.s32 %v1487, %v1488
        %v1490 = vrot.slane %v1489, 1
        %v1491 = vadd.s32 %v1489, %v1490
        %s1492 = vtos %v1491
        %s1493 = scvt.s32.f32 %s1492
        %v1494 = vsel %vm432, 1, 0
        %v1495 = vsel %vm530, %v1494, 0
        %v1496 = vand.u32 %v1495, 65535
        %v1497 = vshrl.u32 %v1495, 16
        %v1498 = vcvt.s32.f32 %v1496
        %v1499 = vcvt.s32.f32 %v1497
        %1500 = vadd.xlane.f32.xlu0 %v1498
        %v1501 = vpop.xlane.xlu0 %1500
        %1502 = vadd.xlane.f32.xlu0 %v1499
        %v1503 = vpop.xlane.xlu0 %1502
        %v1504 = vcvt.f32.s32 %v1501
        %v1505 = vcvt.f32.s32 %v1503
        %v1506 = vshll.u32 %v1505, 16
        %v1507 = vadd.s32 %v1506, %v1504
        %v1508 = vrot.slane %v1507, 4
        %v1509 = vadd.s32 %v1507, %v1508
        %v1510 = vrot.slane %v1509, 2
        %v1511 = vadd.s32 %v1509, %v1510
        %v1512 = vrot.slane %v1511, 1
        %v1513 = vadd.s32 %v1511, %v1512
        %s1514 = vtos %v1513
        %s1515 = scvt.s32.f32 %s1514
        %v1516 = vlaneseq
        %v1517 = vand.u32 %v1516, 127
        %vm1518 = vcmp.eq.s32.totalorder %v1517, 0
        %v1519 = vstv %s457
        %v1520 = vsel %vm1518, %v1519, 0.0
        %vm1521 = vcmp.eq.s32.totalorder %v1517, 1
        %v1522 = vstv %s1471
        %v1523 = vsel %vm1521, %v1522, 0.0
        %v1524 = vadd.f32 %v1520, %v1523
        %vm1525 = vcmp.eq.s32.totalorder %v1517, 2
        %v1526 = vstv %s491
        %v1527 = vsel %vm1525, %v1526, 0.0
        %v1528 = vadd.f32 %v1524, %v1527
        %vm1529 = vcmp.eq.s32.totalorder %v1517, 3
        %v1530 = vstv %s540
        %v1531 = vsel %vm1529, %v1530, 0.0
        %v1532 = vadd.f32 %v1528, %v1531
        %vm1533 = vcmp.eq.s32.totalorder %v1517, 4
        %v1534 = vstv %s1472
        %v1535 = vsel %vm1533, %v1534, 0.0
        %v1536 = vadd.f32 %v1532, %v1535
        %vm1537 = vcmp.eq.s32.totalorder %v1517, 5
        %v1538 = vstv %s1493
        %v1539 = vsel %vm1537, %v1538, 0.0
        %v1540 = vadd.f32 %v1536, %v1539
        %vm1541 = vcmp.eq.s32.totalorder %v1517, 6
        %v1542 = vstv %s1515
        %v1543 = vsel %vm1541, %v1542, 0.0
        %v1544 = vadd.f32 %v1540, %v1543
        %1545 = vst [vmem:[%s386] sm:$0x1] %v1544
        %s1546 = sand.u32 %s238, 1
        %s1547 = scalar_lea.sflag [#allocation3], %s1546
        %s1548 = sand.u32 %s238, 1
        %s1549 = scalar_lea.vmem [#allocation2], %s1548
        // Predicated region
        $region53: #{tpu_custom_call.1} parent=51 // pred_check
          %p1550 = pneg %p248
        $region54: #{tpu_custom_call.1} parent=51 // pred_check_branch
          %1552 = sbr.rel (%p1550) target = $region56
        $region55: #{tpu_custom_call.1} parent=51 // pred_region
          %s1554 = ssub.s32 16, 16
          %1555 = vsyncadd %s1547, %s1554
          %s1556 = smul.addr %s22, 16
          %s1557 = scalar_lea.hbm %s8, %s1556
          %s1559 = sshll.u32 %s1549, 4
          %s1560 = int_to_ptr.vmem [resolvable:$true] %s1559
          %1562 = dma.vmem_to_hbm [thread:$0]  %s1560, 16, %s1557, %s1547
        $region56: #{tpu_custom_call.1} parent=51 // pred_fallthru
          _
      $region52: #{tpu_custom_call.1} parent=5 // pred_fallthru
        _
      %p1563 = scmp.le.s32.totalorder 2, %s17
      // Predicated region
      $region57: #{tpu_custom_call.1} parent=5 // pred_check
        %p1564 = pneg %p1563
      $region58: #{tpu_custom_call.1} parent=5 // pred_check_branch
        %1566 = sbr.rel (%p1564) target = $region60
      $region59: #{tpu_custom_call.1} parent=5 // pred_region
        %s1567 = ssub.s32 %s17, 2
        // Predicated region
        $region61: #{tpu_custom_call.1} parent=59 // pred_check
          %p1568 = pneg %p254
        $region62: #{tpu_custom_call.1} parent=59 // pred_check_branch
          %1570 = sbr.rel (%p1568) target = $region64
        $region63: #{tpu_custom_call.1} parent=59 // pred_region
          %s1571 = sand.u32 %s239, 1
          %s1572 = scalar_lea.sflag [#allocation3], %s1571
          %s1573 = sand.u32 %s239, 1
          %s1574 = scalar_lea.vmem [#allocation2], %s1573
          %1575 = dma.done %s1572, 16
        $region64: #{tpu_custom_call.1} parent=59 // pred_fallthru
          _
      $region60: #{tpu_custom_call.1} parent=5 // pred_fallthru
        _
    $region6: #{tpu_custom_call.1} parent=1 // loop_footer
      %s21 = sadd.s32 1, %s17
    $region7: #{tpu_custom_call.1} parent=1 // loop_footer_branch
      %16 = sbr.rel target = $region3
    $region8: #{tpu_custom_call.1} parent=1 // loop_exit
      _
    %1576 = vsyncpa [#allocation3], 1
    %s1577 = scalar_lea.sflag [#allocation3], 1
    %1578 = vsyncpa %s1577, 1

</llo_original>
